<compile_context>
chip_gen: v6e
topology: v6e:2x2x1
jax: 0.10.0
libtpu: 0.0.40
codegen_flags: <defaults>
</compile_context>

<pallas_src>
import functools

import jax
import jax.numpy as jnp
from jax.experimental import pallas as pl
from jax.experimental.pallas import tpu as pltpu

BN_EPS = 1e-5


def _round_up(x, m):
    return (x + m - 1) // m * m


def _pad2d(x, rows, cols):
    r, c = x.shape
    if r == rows and c == cols:
        return x
    return jnp.pad(x, ((0, rows - r), (0, cols - c)))


# ----------------------------------------------------------------------------
# Fused conv-as-matmul Pallas kernel
#   out = relu( (A @ B) * scale + shift [+ residual] )
# ----------------------------------------------------------------------------

def _fused_conv_matmul_kernel(*refs, relu, has_residual):
    if has_residual:
        a_ref, b_ref, s_ref, t_ref, r_ref, o_ref = refs
    else:
        a_ref, b_ref, s_ref, t_ref, o_ref = refs
        r_ref = None
    k = pl.program_id(2)

    @pl.when(k == 0)
    def _():
        o_ref[...] = jnp.zeros_like(o_ref)

    # f32 accumulation directly into the resident output block.
    o_ref[...] += jnp.dot(a_ref[...], b_ref[...],
                          preferred_element_type=jnp.float32)

    @pl.when(k == pl.num_programs(2) - 1)
    def _():
        y = o_ref[...] * s_ref[...] + t_ref[...]
        if has_residual:
            y = y + r_ref[...]
        if relu:
            y = jnp.maximum(y, 0.0)
        o_ref[...] = y


def fused_conv_matmul(a, b, scale, shift, residual=None, relu=True):
    """(M,K) @ (K,N) with bf16 operands / f32 accumulation and a fused
    per-output-channel affine (BatchNorm), optional residual add and ReLU."""
    M, K = a.shape
    _, N = b.shape
    tm = min(256, _round_up(M, 16))
    tn = min(256, _round_up(N, 128))
    tk = min(2048, _round_up(K, 128))
    Mp, Kp, Np = _round_up(M, tm), _round_up(K, tk), _round_up(N, tn)

    a_p = _pad2d(a, Mp, Kp).astype(jnp.bfloat16)
    b_p = _pad2d(b, Kp, Np).astype(jnp.bfloat16)
    s_p = _pad2d(scale.reshape(1, N).astype(jnp.float32), 1, Np)
    t_p = _pad2d(shift.reshape(1, N).astype(jnp.float32), 1, Np)

    in_specs = [pl.BlockSpec((tm, tk), lambda i, j, k: (i, k)),
                pl.BlockSpec((tk, tn), lambda i, j, k: (k, j)),
                pl.BlockSpec((1, tn), lambda i, j, k: (0, j)),
                pl.BlockSpec((1, tn), lambda i, j, k: (0, j))]
    args = [a_p, b_p, s_p, t_p]
    if residual is not None:
        args.append(_pad2d(residual.astype(jnp.float32), Mp, Np))
        in_specs.append(pl.BlockSpec((tm, tn), lambda i, j, k: (i, j)))

    out = pl.pallas_call(
        functools.partial(_fused_conv_matmul_kernel, relu=relu,
                          has_residual=residual is not None),
        out_shape=jax.ShapeDtypeStruct((Mp, Np), jnp.float32),
        grid_spec=pltpu.PrefetchScalarGridSpec(
            num_scalar_prefetch=0,
            grid=(Mp // tm, Np // tn, Kp // tk),
            in_specs=in_specs,
            out_specs=pl.BlockSpec((tm, tn), lambda i, j, k: (i, j))),
        compiler_params=pltpu.CompilerParams(
            dimension_semantics=("parallel", "parallel", "arbitrary"),
            vmem_limit_bytes=48 * 1024 * 1024),
    )(*args)
    if Mp != M or Np != N:
        out = out[:M, :N]
    return out


# ----------------------------------------------------------------------------
# Conv + BN (+ residual + ReLU) building block (JAX glue around the kernel)
# ----------------------------------------------------------------------------

def _im2col(x, KH, KW, stride, padding, dilation):
    """x: NHWC -> (N*OH*OW, KH*KW*Cin) bf16 patch matrix."""
    N, H, W, Cin = x.shape
    OH = (H + 2 * padding - dilation * (KH - 1) - 1) // stride + 1
    OW = (W + 2 * padding - dilation * (KW - 1) - 1) // stride + 1
    if KH == 1 and KW == 1 and padding == 0:
        a = x[:, ::stride, ::stride, :]
        return a.reshape(N * OH * OW, Cin), (N, OH, OW)
    xp = jnp.pad(x, ((0, 0), (padding, padding), (padding, padding), (0, 0)))
    cols = []
    for kh in range(KH):
        for kw in range(KW):
            cols.append(
                xp[:, kh * dilation: kh * dilation + (OH - 1) * stride + 1: stride,
                      kw * dilation: kw * dilation + (OW - 1) * stride + 1: stride, :])
    # TODO(synk): patch matrix is still materialized in HBM (kept in bf16 to
    # halve the traffic); a fully in-kernel gather over the 9 taps would avoid it.
    a = jnp.concatenate(cols, axis=-1).astype(jnp.bfloat16)
    return a.reshape(N * OH * OW, KH * KW * Cin), (N, OH, OW)


def conv_bn(x, w, bn, *, stride=1, padding=0, dilation=1, relu=False, residual=None):
    """Conv2d (bias=False) + folded BatchNorm + optional residual add + ReLU,
    all applied inside the single fused Pallas matmul."""
    Cout, Cin, KH, KW = w.shape
    a, (N, OH, OW) = _im2col(x, KH, KW, stride, padding, dilation)
    wm = jnp.transpose(w, (2, 3, 1, 0)).reshape(KH * KW * Cin, Cout)
    scale = bn['gamma'] / jnp.sqrt(bn['var'] + BN_EPS)
    shift = bn['beta'] - bn['mean'] * scale
    res2d = None if residual is None else residual.reshape(N * OH * OW, Cout)
    y = fused_conv_matmul(a, wm, scale, shift, residual=res2d, relu=relu)
    return y.reshape(N, OH, OW, Cout)


# ----------------------------------------------------------------------------
# BasicBlock_2 forward (NHWC internally)
# ----------------------------------------------------------------------------

def basic_block_fwd(x, p):
    """out = relu(bn2(conv2(relu(bn1(conv1(x))))) + downsample(x))"""
    s, d = p['stride'], p['dilation']
    out = conv_bn(x, p['conv1'], p['bn1'],
                  stride=s, padding=d, dilation=d, relu=True)
    if p['down'] is not None:
        shortcut = conv_bn(x, p['down']['conv'], p['down']['bn'],
                           stride=s, padding=0, dilation=1, relu=False)
    else:
        shortcut = x
    # bn2 + residual add + final ReLU are fused into conv2's matmul epilogue.
    return conv_bn(out, p['conv2'], p['bn2'],
                   stride=1, padding=d, dilation=d, relu=True, residual=shortcut)


# ----------------------------------------------------------------------------
# Deterministic parameter construction (matches the PyTorch module shapes)
# ----------------------------------------------------------------------------

class KeyGen:
    def __init__(self, seed):
        self.key = jax.random.PRNGKey(seed)

    def __call__(self):
        self.key, sub = jax.random.split(self.key)
        return sub


def make_bn(kg, c):
    return {'gamma': 1.0 + 0.1 * jax.random.normal(kg(), (c,), jnp.float32),
            'beta': 0.05 * jax.random.normal(kg(), (c,), jnp.float32),
            'mean': 0.05 * jax.random.normal(kg(), (c,), jnp.float32),
            'var': 1.0 + 0.1 * jnp.abs(jax.random.normal(kg(), (c,), jnp.float32))}


def make_conv_w(kg, cin, cout, k):
    fan_in = cin * k * k
    return (1.0 / fan_in ** 0.5) * jax.random.normal(kg(), (cout, cin, k, k),
                                                     jnp.float32)


def make_basic_block_params(kg, in_channels, channels, stride=1, dilation=1):
    p = {'stride': stride, 'dilation': dilation,
         'conv1': make_conv_w(kg, in_channels, channels, 3), 'bn1': make_bn(kg, channels),
         'conv2': make_conv_w(kg, channels, channels, 3), 'bn2': make_bn(kg, channels),
         'down': None}
    if stride != 1 or in_channels != channels:
        p['down'] = {'conv': make_conv_w(kg, in_channels, channels, 1),
                     'bn': make_bn(kg, channels)}
    return p


# ----------------------------------------------------------------------------
# Pure-JAX f32 reference (for correctness check only)
# ----------------------------------------------------------------------------

def _ref_conv(x, w, stride, padding, dilation):
    return jax.lax.conv_general_dilated(
        x, jnp.transpose(w, (2, 3, 1, 0)),
        window_strides=(stride, stride),
        padding=[(padding, padding), (padding, padding)],
        rhs_dilation=(dilation, dilation),
        dimension_numbers=('NHWC', 'HWIO', 'NHWC'))


def _ref_bn(x, bn):
    scale = bn['gamma'] / jnp.sqrt(bn['var'] + BN_EPS)
    return x * scale + (bn['beta'] - bn['mean'] * scale)


def ref_basic_block(x, p):
    s, d = p['stride'], p['dilation']
    out = jnp.maximum(_ref_bn(_ref_conv(x, p['conv1'], s, d, d), p['bn1']), 0.0)
    out = _ref_bn(_ref_conv(out, p['conv2'], 1, d, d), p['bn2'])
    if p['down'] is not None:
        sc = _ref_bn(_ref_conv(x, p['down']['conv'], s, 0, 1), p['down']['bn'])
    else:
        sc = x
    return jnp.maximum(out + sc, 0.0)


# ----------------------------------------------------------------------------
# Demo
# ----------------------------------------------------------------------------

if __name__ == "__main__":
    kg = KeyGen(0)
    # Block with downsample shortcut (stride=2, channel change) and a block
    # with identity shortcut (stride=1, dilation=2) - both instantiations of
    # BasicBlock_2.
    block_a = make_basic_block_params(kg, in_channels=4, channels=8, stride=2, dilation=1)
    block_b = make_basic_block_params(kg, in_channels=8, channels=8, stride=1, dilation=2)

    x = jax.random.normal(jax.random.PRNGKey(0), (2, 4, 16, 16), jnp.float32)  # NCHW

    @jax.jit
    def fwd(inp_nchw):
        h = jnp.transpose(inp_nchw, (0, 2, 3, 1)).astype(jnp.float32)   # NCHW -> NHWC
        h = basic_block_fwd(h, block_a)
        h = basic_block_fwd(h, block_b)
        return jnp.transpose(h, (0, 3, 1, 2))                           # NHWC -> NCHW

    y = fwd(x)
    jax.block_until_ready(y)

    assert y.shape == (2, 8, 8, 8), y.shape
    assert y.dtype == jnp.float32

    # Correctness vs. pure-JAX reference (bf16 MXU operands -> loose tolerance).
    x_nhwc = jnp.transpose(x, (0, 2, 3, 1))
    ref = ref_basic_block(ref_basic_block(x_nhwc, block_a), block_b)
    ref = jnp.transpose(ref, (0, 3, 1, 2))
    assert jnp.allclose(y, ref, atol=0.1, rtol=0.05), float(jnp.max(jnp.abs(y - ref)))

    print("KERNEL_OK")
</pallas_src>

<mosaic_0001>
module attributes {stable_mosaic.version = 11 : i64} {
  func.func @_fused_conv_matmul_kernel(%arg0: i32, %arg1: i32, %arg2: i32, %arg3: memref<128x128xbf16, #tpu.memory_space<vmem>>, %arg4: memref<128x128xbf16, #tpu.memory_space<vmem>>, %arg5: memref<1x128xf32, #tpu.memory_space<vmem>>, %arg6: memref<1x128xf32, #tpu.memory_space<vmem>>, %arg7: memref<128x128xf32, #tpu.memory_space<vmem>>) attributes {dimension_semantics = [#tpu.dimension_semantics<parallel>, #tpu.dimension_semantics<parallel>, #tpu.dimension_semantics<arbitrary>], iteration_bounds = array<i64: 1, 1, 1>, scalar_prefetch = 0 : i64, scratch_operands = 0 : i64, tpu.core_type = #tpu.core_type<tc>, window_params = [{transform_indices = @transform_0, window_bounds = array<i64: 128, 128>}, {transform_indices = @transform_1, window_bounds = array<i64: 128, 128>}, {transform_indices = @transform_2, window_bounds = array<i64: 1, 128>}, {transform_indices = @transform_3, window_bounds = array<i64: 1, 128>}, {transform_indices = @transform_4, window_bounds = array<i64: 128, 128>}]} {
    %c0_i32 = arith.constant 0 : i32
    %0 = arith.cmpi eq, %arg2, %c0_i32 : i32
    %1 = arith.extui %0 : i1 to i32
    %c0_i32_0 = arith.constant 0 : i32
    %2 = arith.cmpi ne, %1, %c0_i32_0 : i32
    scf.if %2 {
      %cst_10 = arith.constant 0.000000e+00 : f32
      %12 = vector.broadcast %cst_10 : f32 to vector<128x128xf32>
      %c0_11 = arith.constant 0 : index
      %c0_12 = arith.constant 0 : index
      %13 = vector.load %arg7[%c0_11, %c0_12] : memref<128x128xf32, #tpu.memory_space<vmem>>, vector<128x128xf32>
      tpu.vector_store %arg7[%c0_11, %c0_12], %12 {strides = array<i32>} : memref<128x128xf32, #tpu.memory_space<vmem>>, vector<128x128xf32>,
    } else {
    }
    %c0 = arith.constant 0 : index
    %c0_1 = arith.constant 0 : index
    %3 = vector.load %arg7[%c0, %c0_1] : memref<128x128xf32, #tpu.memory_space<vmem>>, vector<128x128xf32>
    %c0_2 = arith.constant 0 : index
    %c0_3 = arith.constant 0 : index
    %4 = vector.load %arg3[%c0_2, %c0_3] : memref<128x128xbf16, #tpu.memory_space<vmem>>, vector<128x128xbf16>
    %c0_4 = arith.constant 0 : index
    %c0_5 = arith.constant 0 : index
    %5 = vector.load %arg4[%c0_4, %c0_5] : memref<128x128xbf16, #tpu.memory_space<vmem>>, vector<128x128xbf16>
    %cst = arith.constant dense<0.000000e+00> : vector<128x128xf32>
    %6 = tpu.matmul %4, %5, %cst {dimension_numbers = #tpu.dot_dimension_numbers<[1], [0], [0], [1], [0, 0, 1, 1], [], []>} : vector<128x128xbf16>, vector<128x128xbf16>, vector<128x128xf32> -> vector<128x128xf32>
    %7 = arith.addf %3, %6 : vector<128x128xf32>
    %c0_6 = arith.constant 0 : index
    %c0_7 = arith.constant 0 : index
    %8 = vector.load %arg7[%c0_6, %c0_7] : memref<128x128xf32, #tpu.memory_space<vmem>>, vector<128x128xf32>
    tpu.vector_store %arg7[%c0_6, %c0_7], %7 {strides = array<i32>} : memref<128x128xf32, #tpu.memory_space<vmem>>, vector<128x128xf32>,
    %c0_i32_8 = arith.constant 0 : i32
    %9 = arith.cmpi eq, %arg2, %c0_i32_8 : i32
    %10 = arith.extui %9 : i1 to i32
    %c0_i32_9 = arith.constant 0 : i32
    %11 = arith.cmpi ne, %10, %c0_i32_9 : i32
    scf.if %11 {
      %c0_10 = arith.constant 0 : index
      %c0_11 = arith.constant 0 : index
      %12 = vector.load %arg7[%c0_10, %c0_11] : memref<128x128xf32, #tpu.memory_space<vmem>>, vector<128x128xf32>
      %c0_12 = arith.constant 0 : index
      %c0_13 = arith.constant 0 : index
      %13 = vector.load %arg5[%c0_12, %c0_13] : memref<1x128xf32, #tpu.memory_space<vmem>>, vector<1x128xf32>
      %14 = vector.broadcast %13 : vector<1x128xf32> to vector<128x128xf32>
      %15 = arith.mulf %12, %14 : vector<128x128xf32>
      %c0_14 = arith.constant 0 : index
      %c0_15 = arith.constant 0 : index
      %16 = vector.load %arg6[%c0_14, %c0_15] : memref<1x128xf32, #tpu.memory_space<vmem>>, vector<1x128xf32>
      %17 = vector.broadcast %16 : vector<1x128xf32> to vector<128x128xf32>
      %18 = arith.addf %15, %17 : vector<128x128xf32>
      %c0_16 = arith.constant 0 : index
      %c0_17 = arith.constant 0 : index
      %19 = vector.load %arg7[%c0_16, %c0_17] : memref<128x128xf32, #tpu.memory_space<vmem>>, vector<128x128xf32>
      tpu.vector_store %arg7[%c0_16, %c0_17], %18 {strides = array<i32>} : memref<128x128xf32, #tpu.memory_space<vmem>>, vector<128x128xf32>,
    } else {
    }
    return
  }
  func.func @transform_0(%arg0: i32, %arg1: i32, %arg2: i32) -> (i32, i32) {
    %c0_i32 = arith.constant 0 : i32
    return %arg0, %arg2 : i32, i32
  }
  func.func @transform_1(%arg0: i32, %arg1: i32, %arg2: i32) -> (i32, i32) {
    %c0_i32 = arith.constant 0 : i32
    return %arg2, %arg1 : i32, i32
  }
  func.func @transform_2(%arg0: i32, %arg1: i32, %arg2: i32) -> (i32, i32) {
    %c0_i32 = arith.constant 0 : i32
    %c0_i32_0 = arith.constant 0 : i32
    return %c0_i32, %arg1 : i32, i32
  }
  func.func @transform_3(%arg0: i32, %arg1: i32, %arg2: i32) -> (i32, i32) {
    %c0_i32 = arith.constant 0 : i32
    %c0_i32_0 = arith.constant 0 : i32
    return %c0_i32, %arg1 : i32, i32
  }
  func.func @transform_4(%arg0: i32, %arg1: i32, %arg2: i32) -> (i32, i32) {
    %c0_i32 = arith.constant 0 : i32
    return %arg0, %arg1 : i32, i32
  }
}

module attributes {stable_mosaic.version = 11 : i64} {
  func.func @_fused_conv_matmul_kernel(%arg0: i32, %arg1: i32, %arg2: i32, %arg3: memref<128x128xbf16, #tpu.memory_space<vmem>>, %arg4: memref<128x128xbf16, #tpu.memory_space<vmem>>, %arg5: memref<1x128xf32, #tpu.memory_space<vmem>>, %arg6: memref<1x128xf32, #tpu.memory_space<vmem>>, %arg7: memref<128x128xf32, #tpu.memory_space<vmem>>) attributes {dimension_semantics = [#tpu.dimension_semantics<parallel>, #tpu.dimension_semantics<parallel>, #tpu.dimension_semantics<arbitrary>], iteration_bounds = array<i64: 1, 1, 1>, scalar_prefetch = 0 : i64, scratch_operands = 0 : i64, tpu.core_type = #tpu.core_type<tc>, window_params = [{transform_indices = @transform_0, window_bounds = array<i64: 128, 128>}, {transform_indices = @transform_1, window_bounds = array<i64: 128, 128>}, {transform_indices = @transform_2, window_bounds = array<i64: 1, 128>}, {transform_indices = @transform_3, window_bounds = array<i64: 1, 128>}, {transform_indices = @transform_4, window_bounds = array<i64: 128, 128>}]} {
    %c0_i32 = arith.constant 0 : i32
    %0 = arith.cmpi eq, %arg2, %c0_i32 : i32
    %1 = arith.extui %0 : i1 to i32
    %c0_i32_0 = arith.constant 0 : i32
    %2 = arith.cmpi ne, %1, %c0_i32_0 : i32
    scf.if %2 {
      %cst_10 = arith.constant 0.000000e+00 : f32
      %12 = vector.broadcast %cst_10 : f32 to vector<128x128xf32>
      %c0_11 = arith.constant 0 : index
      %c0_12 = arith.constant 0 : index
      %13 = vector.load %arg7[%c0_11, %c0_12] : memref<128x128xf32, #tpu.memory_space<vmem>>, vector<128x128xf32>
      tpu.vector_store %arg7[%c0_11, %c0_12], %12 {strides = array<i32>} : memref<128x128xf32, #tpu.memory_space<vmem>>, vector<128x128xf32>,
    } else {
    }
    %c0 = arith.constant 0 : index
    %c0_1 = arith.constant 0 : index
    %3 = vector.load %arg7[%c0, %c0_1] : memref<128x128xf32, #tpu.memory_space<vmem>>, vector<128x128xf32>
    %c0_2 = arith.constant 0 : index
    %c0_3 = arith.constant 0 : index
    %4 = vector.load %arg3[%c0_2, %c0_3] : memref<128x128xbf16, #tpu.memory_space<vmem>>, vector<128x128xbf16>
    %c0_4 = arith.constant 0 : index
    %c0_5 = arith.constant 0 : index
    %5 = vector.load %arg4[%c0_4, %c0_5] : memref<128x128xbf16, #tpu.memory_space<vmem>>, vector<128x128xbf16>
    %cst = arith.constant dense<0.000000e+00> : vector<128x128xf32>
    %6 = tpu.matmul %4, %5, %cst {dimension_numbers = #tpu.dot_dimension_numbers<[1], [0], [0], [1], [0, 0, 1, 1], [], []>} : vector<128x128xbf16>, vector<128x128xbf16>, vector<128x128xf32> -> vector<128x128xf32>
    %7 = arith.addf %3, %6 : vector<128x128xf32>
    %c0_6 = arith.constant 0 : index
    %c0_7 = arith.constant 0 : index
    %8 = vector.load %arg7[%c0_6, %c0_7] : memref<128x128xf32, #tpu.memory_space<vmem>>, vector<128x128xf32>
    tpu.vector_store %arg7[%c0_6, %c0_7], %7 {strides = array<i32>} : memref<128x128xf32, #tpu.memory_space<vmem>>, vector<128x128xf32>,
    %c0_i32_8 = arith.constant 0 : i32
    %9 = arith.cmpi eq, %arg2, %c0_i32_8 : i32
    %10 = arith.extui %9 : i1 to i32
    %c0_i32_9 = arith.constant 0 : i32
    %11 = arith.cmpi ne, %10, %c0_i32_9 : i32
    scf.if %11 {
      %c0_10 = arith.constant 0 : index
      %c0_11 = arith.constant 0 : index
      %12 = vector.load %arg7[%c0_10, %c0_11] : memref<128x128xf32, #tpu.memory_space<vmem>>, vector<128x128xf32>
      %c0_12 = arith.constant 0 : index
      %c0_13 = arith.constant 0 : index
      %13 = vector.load %arg5[%c0_12, %c0_13] : memref<1x128xf32, #tpu.memory_space<vmem>>, vector<1x128xf32>
      %14 = vector.broadcast %13 : vector<1x128xf32> to vector<128x128xf32>
      %15 = arith.mulf %12, %14 : vector<128x128xf32>
      %c0_14 = arith.constant 0 : index
      %c0_15 = arith.constant 0 : index
      %16 = vector.load %arg6[%c0_14, %c0_15] : memref<1x128xf32, #tpu.memory_space<vmem>>, vector<1x128xf32>
      %17 = vector.broadcast %16 : vector<1x128xf32> to vector<128x128xf32>
      %18 = arith.addf %15, %17 : vector<128x128xf32>
      %cst_16 = arith.constant 0.000000e+00 : f32
      %19 = vector.broadcast %cst_16 : f32 to vector<128x128xf32>
      %20 = arith.maximumf %18, %19 : vector<128x128xf32>
      %c0_17 = arith.constant 0 : index
      %c0_18 = arith.constant 0 : index
      %21 = vector.load %arg7[%c0_17, %c0_18] : memref<128x128xf32, #tpu.memory_space<vmem>>, vector<128x128xf32>
      tpu.vector_store %arg7[%c0_17, %c0_18], %20 {strides = array<i32>} : memref<128x128xf32, #tpu.memory_space<vmem>>, vector<128x128xf32>,
    } else {
    }
    return
  }
  func.func @transform_0(%arg0: i32, %arg1: i32, %arg2: i32) -> (i32, i32) {
    %c0_i32 = arith.constant 0 : i32
    return %arg0, %arg2 : i32, i32
  }
  func.func @transform_1(%arg0: i32, %arg1: i32, %arg2: i32) -> (i32, i32) {
    %c0_i32 = arith.constant 0 : i32
    return %arg2, %arg1 : i32, i32
  }
  func.func @transform_2(%arg0: i32, %arg1: i32, %arg2: i32) -> (i32, i32) {
    %c0_i32 = arith.constant 0 : i32
    %c0_i32_0 = arith.constant 0 : i32
    return %c0_i32, %arg1 : i32, i32
  }
  func.func @transform_3(%arg0: i32, %arg1: i32, %arg2: i32) -> (i32, i32) {
    %c0_i32 = arith.constant 0 : i32
    %c0_i32_0 = arith.constant 0 : i32
    return %c0_i32, %arg1 : i32, i32
  }
  func.func @transform_4(%arg0: i32, %arg1: i32, %arg2: i32) -> (i32, i32) {
    %c0_i32 = arith.constant 0 : i32
    return %arg0, %arg1 : i32, i32
  }
}

module attributes {stable_mosaic.version = 11 : i64} {
  func.func @_fused_conv_matmul_kernel(%arg0: i32, %arg1: i32, %arg2: i32, %arg3: memref<128x128xbf16, #tpu.memory_space<vmem>>, %arg4: memref<128x128xbf16, #tpu.memory_space<vmem>>, %arg5: memref<1x128xf32, #tpu.memory_space<vmem>>, %arg6: memref<1x128xf32, #tpu.memory_space<vmem>>, %arg7: memref<128x128xf32, #tpu.memory_space<vmem>>, %arg8: memref<128x128xf32, #tpu.memory_space<vmem>>) attributes {dimension_semantics = [#tpu.dimension_semantics<parallel>, #tpu.dimension_semantics<parallel>, #tpu.dimension_semantics<arbitrary>], iteration_bounds = array<i64: 1, 1, 1>, scalar_prefetch = 0 : i64, scratch_operands = 0 : i64, tpu.core_type = #tpu.core_type<tc>, window_params = [{transform_indices = @transform_0, window_bounds = array<i64: 128, 128>}, {transform_indices = @transform_1, window_bounds = array<i64: 128, 128>}, {transform_indices = @transform_2, window_bounds = array<i64: 1, 128>}, {transform_indices = @transform_3, window_bounds = array<i64: 1, 128>}, {transform_indices = @transform_4, window_bounds = array<i64: 128, 128>}, {transform_indices = @transform_5, window_bounds = array<i64: 128, 128>}]} {
    %c0_i32 = arith.constant 0 : i32
    %0 = arith.cmpi eq, %arg2, %c0_i32 : i32
    %1 = arith.extui %0 : i1 to i32
    %c0_i32_0 = arith.constant 0 : i32
    %2 = arith.cmpi ne, %1, %c0_i32_0 : i32
    scf.if %2 {
      %cst_10 = arith.constant 0.000000e+00 : f32
      %12 = vector.broadcast %cst_10 : f32 to vector<128x128xf32>
      %c0_11 = arith.constant 0 : index
      %c0_12 = arith.constant 0 : index
      %13 = vector.load %arg8[%c0_11, %c0_12] : memref<128x128xf32, #tpu.memory_space<vmem>>, vector<128x128xf32>
      tpu.vector_store %arg8[%c0_11, %c0_12], %12 {strides = array<i32>} : memref<128x128xf32, #tpu.memory_space<vmem>>, vector<128x128xf32>,
    } else {
    }
    %c0 = arith.constant 0 : index
    %c0_1 = arith.constant 0 : index
    %3 = vector.load %arg8[%c0, %c0_1] : memref<128x128xf32, #tpu.memory_space<vmem>>, vector<128x128xf32>
    %c0_2 = arith.constant 0 : index
    %c0_3 = arith.constant 0 : index
    %4 = vector.load %arg3[%c0_2, %c0_3] : memref<128x128xbf16, #tpu.memory_space<vmem>>, vector<128x128xbf16>
    %c0_4 = arith.constant 0 : index
    %c0_5 = arith.constant 0 : index
    %5 = vector.load %arg4[%c0_4, %c0_5] : memref<128x128xbf16, #tpu.memory_space<vmem>>, vector<128x128xbf16>
    %cst = arith.constant dense<0.000000e+00> : vector<128x128xf32>
    %6 = tpu.matmul %4, %5, %cst {dimension_numbers = #tpu.dot_dimension_numbers<[1], [0], [0], [1], [0, 0, 1, 1], [], []>} : vector<128x128xbf16>, vector<128x128xbf16>, vector<128x128xf32> -> vector<128x128xf32>
    %7 = arith.addf %3, %6 : vector<128x128xf32>
    %c0_6 = arith.constant 0 : index
    %c0_7 = arith.constant 0 : index
    %8 = vector.load %arg8[%c0_6, %c0_7] : memref<128x128xf32, #tpu.memory_space<vmem>>, vector<128x128xf32>
    tpu.vector_store %arg8[%c0_6, %c0_7], %7 {strides = array<i32>} : memref<128x128xf32, #tpu.memory_space<vmem>>, vector<128x128xf32>,
    %c0_i32_8 = arith.constant 0 : i32
    %9 = arith.cmpi eq, %arg2, %c0_i32_8 : i32
    %10 = arith.extui %9 : i1 to i32
    %c0_i32_9 = arith.constant 0 : i32
    %11 = arith.cmpi ne, %10, %c0_i32_9 : i32
    scf.if %11 {
      %c0_10 = arith.constant 0 : index
      %c0_11 = arith.constant 0 : index
      %12 = vector.load %arg8[%c0_10, %c0_11] : memref<128x128xf32, #tpu.memory_space<vmem>>, vector<128x128xf32>
      %c0_12 = arith.constant 0 : index
      %c0_13 = arith.constant 0 : index
      %13 = vector.load %arg5[%c0_12, %c0_13] : memref<1x128xf32, #tpu.memory_space<vmem>>, vector<1x128xf32>
      %14 = vector.broadcast %13 : vector<1x128xf32> to vector<128x128xf32>
      %15 = arith.mulf %12, %14 : vector<128x128xf32>
      %c0_14 = arith.constant 0 : index
      %c0_15 = arith.constant 0 : index
      %16 = vector.load %arg6[%c0_14, %c0_15] : memref<1x128xf32, #tpu.memory_space<vmem>>, vector<1x128xf32>
      %17 = vector.broadcast %16 : vector<1x128xf32> to vector<128x128xf32>
      %18 = arith.addf %15, %17 : vector<128x128xf32>
      %c0_16 = arith.constant 0 : index
      %c0_17 = arith.constant 0 : index
      %19 = vector.load %arg7[%c0_16, %c0_17] : memref<128x128xf32, #tpu.memory_space<vmem>>, vector<128x128xf32>
      %20 = arith.addf %18, %19 : vector<128x128xf32>
      %cst_18 = arith.constant 0.000000e+00 : f32
      %21 = vector.broadcast %cst_18 : f32 to vector<128x128xf32>
      %22 = arith.maximumf %20, %21 : vector<128x128xf32>
      %c0_19 = arith.constant 0 : index
      %c0_20 = arith.constant 0 : index
      %23 = vector.load %arg8[%c0_19, %c0_20] : memref<128x128xf32, #tpu.memory_space<vmem>>, vector<128x128xf32>
      tpu.vector_store %arg8[%c0_19, %c0_20], %22 {strides = array<i32>} : memref<128x128xf32, #tpu.memory_space<vmem>>, vector<128x128xf32>,
    } else {
    }
    return
  }
  func.func @transform_0(%arg0: i32, %arg1: i32, %arg2: i32) -> (i32, i32) {
    %c0_i32 = arith.constant 0 : i32
    return %arg0, %arg2 : i32, i32
  }
  func.func @transform_1(%arg0: i32, %arg1: i32, %arg2: i32) -> (i32, i32) {
    %c0_i32 = arith.constant 0 : i32
    return %arg2, %arg1 : i32, i32
  }
  func.func @transform_2(%arg0: i32, %arg1: i32, %arg2: i32) -> (i32, i32) {
    %c0_i32 = arith.constant 0 : i32
    %c0_i32_0 = arith.constant 0 : i32
    return %c0_i32, %arg1 : i32, i32
  }
  func.func @transform_3(%arg0: i32, %arg1: i32, %arg2: i32) -> (i32, i32) {
    %c0_i32 = arith.constant 0 : i32
    %c0_i32_0 = arith.constant 0 : i32
    return %c0_i32, %arg1 : i32, i32
  }
  func.func @transform_4(%arg0: i32, %arg1: i32, %arg2: i32) -> (i32, i32) {
    %c0_i32 = arith.constant 0 : i32
    return %arg0, %arg1 : i32, i32
  }
  func.func @transform_5(%arg0: i32, %arg1: i32, %arg2: i32) -> (i32, i32) {
    %c0_i32 = arith.constant 0 : i32
    return %arg0, %arg1 : i32, i32
  }
}

</mosaic_0001>

<llo_original>
// kernel: fwd.6
$region0: #{fwd.6}
  #allocation0 [shape = 'u32[]', space=smem, size = 0x4, offset = 0x4, fixed_abs, tag = 'smem constant byte address 0x4 - core index']
  #allocation1 [shape = 'u32[144,128]{1,0:T(1,128)}', space=vmem, size = 0x12000, scoped, tag = 'internal scratch']
  %s0 = inlined_call_operand.vmem [shape: bf16[128,128], index: 0, kind: input, shape index: {}]
  %s1 = inlined_call_operand.vmem [shape: bf16[128,128], index: 1, kind: input, shape index: {}]
  %s2 = inlined_call_operand.vmem [shape: f32[1,128], index: 2, kind: input, shape index: {}]
  %s3 = inlined_call_operand.vmem [shape: f32[1,128], index: 3, kind: input, shape index: {}]
  %s4 = inlined_call_operand.vmem [shape: f32[128,128], index: 4, kind: output, shape index: {}]
  %s5 = sld [smem:[#allocation0]]
  $region34: #{fwd.6} parent=0
    _
  %s7 = ssub.s32 1, %s5
  %s8 = scalar_select 0, %s7, %s5
  // Predicated region
  $region2: #{fwd.6} parent=0 // pred_check
    _
  $region3: #{fwd.6} parent=0 // pred_check_branch
    %10 = sbr.rel (0) target = $region5
  $region4: #{fwd.6} parent=0 // pred_region
    _
  $region5: #{fwd.6} parent=0 // pred_fallthru
    _
  // Predicated region
  $region6: #{fwd.6} parent=0 // pred_check
    _
  $region7: #{fwd.6} parent=0 // pred_check_branch
    %12 = sbr.rel (0) target = $region9
  $region8: #{fwd.6} parent=0 // pred_region
    _
  $region9: #{fwd.6} parent=0 // pred_fallthru
    _
  // Predicated region
  $region10: #{fwd.6} parent=0 // pred_check
    _
  $region11: #{fwd.6} parent=0 // pred_check_branch
    %14 = sbr.rel (0) target = $region13
  $region12: #{fwd.6} parent=0 // pred_region
    _
  $region13: #{fwd.6} parent=0 // pred_fallthru
    _
  // Predicated region
  $region14: #{fwd.6} parent=0 // pred_check
    _
  $region15: #{fwd.6} parent=0 // pred_check_branch
    %16 = sbr.rel (0) target = $region17
  $region16: #{fwd.6} parent=0 // pred_region
    _
  $region17: #{fwd.6} parent=0 // pred_fallthru
    _
  %p18 = scmp.eq.s32.totalorder 0, 0
  // Predicated region
  $region18: #{fwd.6} parent=0 // pred_check
    %p19 = pneg %p18
  $region19: #{fwd.6} parent=0 // pred_check_branch
    %21 = sbr.rel (%p19) target = $region21
  $region20: #{fwd.6} parent=0 // pred_region
    %22 = vst [vmem:[%s4] sm:$0xff] 0.0
    %23 = vst [vmem:[%s4 + $0x8] sm:$0xff] 0.0
    %24 = vst [vmem:[%s4 + $0x10] sm:$0xff] 0.0
    %25 = vst [vmem:[%s4 + $0x18] sm:$0xff] 0.0
    %26 = vst [vmem:[%s4 + $0x20] sm:$0xff] 0.0
    %27 = vst [vmem:[%s4 + $0x28] sm:$0xff] 0.0
    %28 = vst [vmem:[%s4 + $0x30] sm:$0xff] 0.0
    %29 = vst [vmem:[%s4 + $0x38] sm:$0xff] 0.0
    %30 = vst [vmem:[%s4 + $0x40] sm:$0xff] 0.0
    %31 = vst [vmem:[%s4 + $0x48] sm:$0xff] 0.0
    %32 = vst [vmem:[%s4 + $0x50] sm:$0xff] 0.0
    %33 = vst [vmem:[%s4 + $0x58] sm:$0xff] 0.0
    %34 = vst [vmem:[%s4 + $0x60] sm:$0xff] 0.0
    %35 = vst [vmem:[%s4 + $0x68] sm:$0xff] 0.0
    %36 = vst [vmem:[%s4 + $0x70] sm:$0xff] 0.0
    %37 = vst [vmem:[%s4 + $0x78] sm:$0xff] 0.0
  $region21: #{fwd.6} parent=0 // pred_fallthru
    _
  %v38 = vld [vmem:[%s4] sm:$0xff]
  %v39 = vld [vmem:[%s4 + $0x8] sm:$0xff]
  %v40 = vld [vmem:[%s4 + $0x10] sm:$0xff]
  %v41 = vld [vmem:[%s4 + $0x18] sm:$0xff]
  %v42 = vld [vmem:[%s4 + $0x20] sm:$0xff]
  %v43 = vld [vmem:[%s4 + $0x28] sm:$0xff]
  %v44 = vld [vmem:[%s4 + $0x30] sm:$0xff]
  %v45 = vld [vmem:[%s4 + $0x38] sm:$0xff]
  %v46 = vld [vmem:[%s4 + $0x40] sm:$0xff]
  %v47 = vld [vmem:[%s4 + $0x48] sm:$0xff]
  %v48 = vld [vmem:[%s4 + $0x50] sm:$0xff]
  %v49 = vld [vmem:[%s4 + $0x58] sm:$0xff]
  %v50 = vld [vmem:[%s4 + $0x60] sm:$0xff]
  %v51 = vld [vmem:[%s4 + $0x68] sm:$0xff]
  %v52 = vld [vmem:[%s4 + $0x70] sm:$0xff]
  %v53 = vld [vmem:[%s4 + $0x78] sm:$0xff]
  %v54 = vld [vmem:[%s0] sm:$0xf]
  %v55 = vld [vmem:[%s0 + $0x4] sm:$0xf]
  %v56 = vld [vmem:[%s0 + $0x8] sm:$0xf]
  %v57 = vld [vmem:[%s0 + $0xc] sm:$0xf]
  %v58 = vld [vmem:[%s0 + $0x10] sm:$0xf]
  %v59 = vld [vmem:[%s0 + $0x14] sm:$0xf]
  %v60 = vld [vmem:[%s0 + $0x18] sm:$0xf]
  %v61 = vld [vmem:[%s0 + $0x1c] sm:$0xf]
  %v62 = vld [vmem:[%s0 + $0x20] sm:$0xf]
  %v63 = vld [vmem:[%s0 + $0x24] sm:$0xf]
  %v64 = vld [vmem:[%s0 + $0x28] sm:$0xf]
  %v65 = vld [vmem:[%s0 + $0x2c] sm:$0xf]
  %v66 = vld [vmem:[%s0 + $0x30] sm:$0xf]
  %v67 = vld [vmem:[%s0 + $0x34] sm:$0xf]
  %v68 = vld [vmem:[%s0 + $0x38] sm:$0xf]
  %v69 = vld [vmem:[%s0 + $0x3c] sm:$0xf]
  %v70 = vld [vmem:[%s1] sm:$0xf]
  %v71 = vld [vmem:[%s1 + $0x4] sm:$0xf]
  %v72 = vld [vmem:[%s1 + $0x8] sm:$0xf]
  %v73 = vld [vmem:[%s1 + $0xc] sm:$0xf]
  %v74 = vld [vmem:[%s1 + $0x10] sm:$0xf]
  %v75 = vld [vmem:[%s1 + $0x14] sm:$0xf]
  %v76 = vld [vmem:[%s1 + $0x18] sm:$0xf]
  %v77 = vld [vmem:[%s1 + $0x1c] sm:$0xf]
  %v78 = vld [vmem:[%s1 + $0x20] sm:$0xf]
  %v79 = vld [vmem:[%s1 + $0x24] sm:$0xf]
  %v80 = vld [vmem:[%s1 + $0x28] sm:$0xf]
  %v81 = vld [vmem:[%s1 + $0x2c] sm:$0xf]
  %v82 = vld [vmem:[%s1 + $0x30] sm:$0xf]
  %v83 = vld [vmem:[%s1 + $0x34] sm:$0xf]
  %v84 = vld [vmem:[%s1 + $0x38] sm:$0xf]
  %v85 = vld [vmem:[%s1 + $0x3c] sm:$0xf]
  %v102 = vunpack.c.l.b16 %v54
  %v103 = vunpack.c.l.b16 %v55
  %v104 = vunpack.c.l.b16 %v56
  %v105 = vunpack.c.l.b16 %v57
  %v106 = vunpack.c.l.b16 %v58
  %v107 = vunpack.c.l.b16 %v59
  %v108 = vunpack.c.l.b16 %v60
  %v109 = vunpack.c.l.b16 %v61
  %v110 = vunpack.c.l.b16 %v62
  %v111 = vunpack.c.l.b16 %v63
  %v112 = vunpack.c.l.b16 %v64
  %v113 = vunpack.c.l.b16 %v65
  %v114 = vunpack.c.l.b16 %v66
  %v115 = vunpack.c.l.b16 %v67
  %v116 = vunpack.c.l.b16 %v68
  %v117 = vunpack.c.l.b16 %v69
  %v118 = vpack.c.b16 %v103, %v102
  %v119 = vpack.c.b16 %v105, %v104
  %v120 = vpack.c.b16 %v107, %v106
  %v121 = vpack.c.b16 %v109, %v108
  %v122 = vpack.c.b16 %v111, %v110
  %v123 = vpack.c.b16 %v113, %v112
  %v124 = vpack.c.b16 %v115, %v114
  %v125 = vpack.c.b16 %v117, %v116
  %v150 = vunpack.c.l.b16 %v70
  %v151 = vunpack.c.l.b16 %v71
  %v152 = vunpack.c.l.b16 %v72
  %v153 = vunpack.c.l.b16 %v73
  %v154 = vunpack.c.l.b16 %v74
  %v155 = vunpack.c.l.b16 %v75
  %v156 = vunpack.c.l.b16 %v76
  %v157 = vunpack.c.l.b16 %v77
  %v158 = vunpack.c.l.b16 %v78
  %v159 = vunpack.c.l.b16 %v79
  %v160 = vunpack.c.l.b16 %v80
  %v161 = vunpack.c.l.b16 %v81
  %v162 = vunpack.c.l.b16 %v82
  %v163 = vunpack.c.l.b16 %v83
  %v164 = vunpack.c.l.b16 %v84
  %v165 = vunpack.c.l.b16 %v85
  %v166 = vpack.c.b16 %v151, %v150
  %v167 = vpack.c.b16 %v153, %v152
  %v168 = vpack.c.b16 %v155, %v154
  %v169 = vpack.c.b16 %v157, %v156
  %v170 = vpack.c.b16 %v159, %v158
  %v171 = vpack.c.b16 %v161, %v160
  %v172 = vpack.c.b16 %v163, %v162
  %v173 = vpack.c.b16 %v165, %v164
  %182 = vmatprep.subr.bf16.mxu0 0
  %183 = vmatpush1.bf16.msra.mxu0 %v173
  %184 = vmatprep.subr.bf16.mxu0 0
  %185 = vmatpush1.bf16.msra.mxu0 %v172
  %186 = vmatprep.subr.bf16.mxu0 0
  %187 = vmatpush1.bf16.msra.mxu0 %v171
  %188 = vmatprep.subr.bf16.mxu0 0
  %189 = vmatpush1.bf16.msra.mxu0 %v170
  %190 = vmatprep.subr.bf16.mxu0 0
  %191 = vmatpush1.bf16.msra.mxu0 %v169
  %192 = vmatprep.subr.bf16.mxu0 0
  %193 = vmatpush1.bf16.msra.mxu0 %v168
  %194 = vmatprep.subr.bf16.mxu0 0
  %195 = vmatpush1.bf16.msra.mxu0 %v167
  %196 = vmatprep.subr.bf16.mxu0 0
  %197 = vmatpush1.bf16.msra.mxu0 %v166
  %198 = vmatprep.subr.bf16.mxu0 0
  %199 = vmatpush2.bf16.msra.mxu0 0
  %200 = vmatprep.subr.bf16.mxu0 0
  %201 = vmatpush2.bf16.msra.mxu0 0
  %202 = vmatprep.subr.bf16.mxu0 0
  %203 = vmatpush2.bf16.msra.mxu0 0
  %204 = vmatprep.subr.bf16.mxu0 0
  %205 = vmatpush2.bf16.msra.mxu0 0
  %206 = vmatprep.subr.bf16.mxu0 0
  %207 = vmatpush2.bf16.msra.mxu0 0
  %208 = vmatprep.subr.bf16.mxu0 0
  %209 = vmatpush2.bf16.msra.mxu0 0
  %210 = vmatprep.subr.bf16.mxu0 0
  %211 = vmatpush2.bf16.msra.mxu0 0
  %212 = vmatprep.subr.bf16.mxu0 0
  %213 = vmatpush2.bf16.msra.mxu0 0
  %214 = vmatprep.mubr.bf16.mxu0 0
  %215 = vmatmul.mubr.bf16.gmra.mxu0 %v118
  %v216 = vpop.f32.mrf.mxu0
  %v217 = vadd.f32 0.0, %v216
  %v218 = vpop.f32.mrf.mxu0
  %v219 = vpop.f32.mrf.mxu0
  %v220 = vadd.f32 0.0, %v219
  %v221 = vpop.f32.mrf.mxu0
  %222 = vmatprep.mubr.bf16.mxu0 0
  %223 = vmatmul.mubr.bf16.gmra.mxu0 %v119
  %v224 = vpop.f32.mrf.mxu0
  %v225 = vadd.f32 0.0, %v224
  %v226 = vpop.f32.mrf.mxu0
  %v227 = vpop.f32.mrf.mxu0
  %v228 = vadd.f32 0.0, %v227
  %v229 = vpop.f32.mrf.mxu0
  %230 = vmatprep.mubr.bf16.mxu0 0
  %231 = vmatmul.mubr.bf16.gmra.mxu0 %v120
  %v232 = vpop.f32.mrf.mxu0
  %v233 = vadd.f32 0.0, %v232
  %v234 = vpop.f32.mrf.mxu0
  %v235 = vpop.f32.mrf.mxu0
  %v236 = vadd.f32 0.0, %v235
  %v237 = vpop.f32.mrf.mxu0
  %238 = vmatprep.mubr.bf16.mxu0 0
  %239 = vmatmul.mubr.bf16.gmra.mxu0 %v121
  %v240 = vpop.f32.mrf.mxu0
  %v241 = vadd.f32 0.0, %v240
  %v242 = vpop.f32.mrf.mxu0
  %v243 = vpop.f32.mrf.mxu0
  %v244 = vadd.f32 0.0, %v243
  %v245 = vpop.f32.mrf.mxu0
  %246 = vmatprep.mubr.bf16.mxu0 0
  %247 = vmatmul.mubr.bf16.gmra.mxu0 %v122
  %v248 = vpop.f32.mrf.mxu0
  %v249 = vadd.f32 0.0, %v248
  %v250 = vpop.f32.mrf.mxu0
  %v251 = vpop.f32.mrf.mxu0
  %v252 = vadd.f32 0.0, %v251
  %v253 = vpop.f32.mrf.mxu0
  %254 = vmatprep.mubr.bf16.mxu0 0
  %255 = vmatmul.mubr.bf16.gmra.mxu0 %v123
  %v256 = vpop.f32.mrf.mxu0
  %v257 = vadd.f32 0.0, %v256
  %v258 = vpop.f32.mrf.mxu0
  %v259 = vpop.f32.mrf.mxu0
  %v260 = vadd.f32 0.0, %v259
  %v261 = vpop.f32.mrf.mxu0
  %262 = vmatprep.mubr.bf16.mxu0 0
  %263 = vmatmul.mubr.bf16.gmra.mxu0 %v124
  %v264 = vpop.f32.mrf.mxu0
  %v265 = vadd.f32 0.0, %v264
  %v266 = vpop.f32.mrf.mxu0
  %v267 = vpop.f32.mrf.mxu0
  %v268 = vadd.f32 0.0, %v267
  %v269 = vpop.f32.mrf.mxu0
  %270 = vmatprep.mubr.bf16.mxu0 0
  %271 = vmatmul.mubr.bf16.gmra.mxu0 %v125
  %v272 = vpop.f32.mrf.mxu0
  %v273 = vadd.f32 0.0, %v272
  %v274 = vpop.f32.mrf.mxu0
  %v275 = vpop.f32.mrf.mxu0
  %v276 = vadd.f32 0.0, %v275
  %v277 = vpop.f32.mrf.mxu0
  %278 = vdwg.mxu0
  %v279 = vadd.f32 %v38, %v217
  %v280 = vadd.f32 %v39, %v220
  %v281 = vadd.f32 %v40, %v225
  %v282 = vadd.f32 %v41, %v228
  %v283 = vadd.f32 %v42, %v233
  %v284 = vadd.f32 %v43, %v236
  %v285 = vadd.f32 %v44, %v241
  %v286 = vadd.f32 %v45, %v244
  %v287 = vadd.f32 %v46, %v249
  %v288 = vadd.f32 %v47, %v252
  %v289 = vadd.f32 %v48, %v257
  %v290 = vadd.f32 %v49, %v260
  %v291 = vadd.f32 %v50, %v265
  %v292 = vadd.f32 %v51, %v268
  %v293 = vadd.f32 %v52, %v273
  %v294 = vadd.f32 %v53, %v276
  %295 = vst [vmem:[%s4] sm:$0xff] %v279
  %296 = vst [vmem:[%s4 + $0x8] sm:$0xff] %v280
  %297 = vst [vmem:[%s4 + $0x10] sm:$0xff] %v281
  %298 = vst [vmem:[%s4 + $0x18] sm:$0xff] %v282
  %299 = vst [vmem:[%s4 + $0x20] sm:$0xff] %v283
  %300 = vst [vmem:[%s4 + $0x28] sm:$0xff] %v284
  %301 = vst [vmem:[%s4 + $0x30] sm:$0xff] %v285
  %302 = vst [vmem:[%s4 + $0x38] sm:$0xff] %v286
  %303 = vst [vmem:[%s4 + $0x40] sm:$0xff] %v287
  %304 = vst [vmem:[%s4 + $0x48] sm:$0xff] %v288
  %305 = vst [vmem:[%s4 + $0x50] sm:$0xff] %v289
  %306 = vst [vmem:[%s4 + $0x58] sm:$0xff] %v290
  %307 = vst [vmem:[%s4 + $0x60] sm:$0xff] %v291
  %308 = vst [vmem:[%s4 + $0x68] sm:$0xff] %v292
  %309 = vst [vmem:[%s4 + $0x70] sm:$0xff] %v293
  %310 = vst [vmem:[%s4 + $0x78] sm:$0xff] %v294
  // Predicated region
  $region22: #{fwd.6} parent=0 // pred_check
    %p311 = pneg %p18
  $region23: #{fwd.6} parent=0 // pred_check_branch
    %313 = sbr.rel (%p311) target = $region25
  $region24: #{fwd.6} parent=0 // pred_region
    %v314 = vld [vmem:[%s4] sm:$0xff]
    %v315 = vld [vmem:[%s4 + $0x8] sm:$0xff]
    %v316 = vld [vmem:[%s4 + $0x10] sm:$0xff]
    %v317 = vld [vmem:[%s4 + $0x18] sm:$0xff]
    %v318 = vld [vmem:[%s4 + $0x20] sm:$0xff]
    %v319 = vld [vmem:[%s4 + $0x28] sm:$0xff]
    %v320 = vld [vmem:[%s4 + $0x30] sm:$0xff]
    %v321 = vld [vmem:[%s4 + $0x38] sm:$0xff]
    %v322 = vld [vmem:[%s4 + $0x40] sm:$0xff]
    %v323 = vld [vmem:[%s4 + $0x48] sm:$0xff]
    %v324 = vld [vmem:[%s4 + $0x50] sm:$0xff]
    %v325 = vld [vmem:[%s4 + $0x58] sm:$0xff]
    %v326 = vld [vmem:[%s4 + $0x60] sm:$0xff]
    %v327 = vld [vmem:[%s4 + $0x68] sm:$0xff]
    %v328 = vld [vmem:[%s4 + $0x70] sm:$0xff]
    %v329 = vld [vmem:[%s4 + $0x78] sm:$0xff]
    %v330 = vld [vmem:[%s2] sm:$0x1]
    %v332 = vlaneseq
    %v333 = vshrl.u32 %v332, 7
    %v334 = vsub.s32 0, %v333
    %v335 = vrot.slane %v330, %v334
    %v337 = vmul.f32 %v314, %v335
    %v338 = vmul.f32 %v315, %v335
    %v339 = vmul.f32 %v316, %v335
    %v340 = vmul.f32 %v317, %v335
    %v341 = vmul.f32 %v318, %v335
    %v342 = vmul.f32 %v319, %v335
    %v343 = vmul.f32 %v320, %v335
    %v344 = vmul.f32 %v321, %v335
    %v345 = vmul.f32 %v322, %v335
    %v346 = vmul.f32 %v323, %v335
    %v347 = vmul.f32 %v324, %v335
    %v348 = vmul.f32 %v325, %v335
    %v349 = vmul.f32 %v326, %v335
    %v350 = vmul.f32 %v327, %v335
    %v351 = vmul.f32 %v328, %v335
    %v352 = vmul.f32 %v329, %v335
    %v353 = vld [vmem:[%s3] sm:$0x1]
    %v355 = vlaneseq
    %v356 = vshrl.u32 %v355, 7
    %v357 = vsub.s32 0, %v356
    %v358 = vrot.slane %v353, %v357
    %v360 = vadd.f32 %v337, %v358
    %v361 = vadd.f32 %v338, %v358
    %v362 = vadd.f32 %v339, %v358
    %v363 = vadd.f32 %v340, %v358
    %v364 = vadd.f32 %v341, %v358
    %v365 = vadd.f32 %v342, %v358
    %v366 = vadd.f32 %v343, %v358
    %v367 = vadd.f32 %v344, %v358
    %v368 = vadd.f32 %v345, %v358
    %v369 = vadd.f32 %v346, %v358
    %v370 = vadd.f32 %v347, %v358
    %v371 = vadd.f32 %v348, %v358
    %v372 = vadd.f32 %v349, %v358
    %v373 = vadd.f32 %v350, %v358
    %v374 = vadd.f32 %v351, %v358
    %v375 = vadd.f32 %v352, %v358
    %376 = vst [vmem:[%s4] sm:$0xff] %v360
    %377 = vst [vmem:[%s4 + $0x8] sm:$0xff] %v361
    %378 = vst [vmem:[%s4 + $0x10] sm:$0xff] %v362
    %379 = vst [vmem:[%s4 + $0x18] sm:$0xff] %v363
    %380 = vst [vmem:[%s4 + $0x20] sm:$0xff] %v364
    %381 = vst [vmem:[%s4 + $0x28] sm:$0xff] %v365
    %382 = vst [vmem:[%s4 + $0x30] sm:$0xff] %v366
    %383 = vst [vmem:[%s4 + $0x38] sm:$0xff] %v367
    %384 = vst [vmem:[%s4 + $0x40] sm:$0xff] %v368
    %385 = vst [vmem:[%s4 + $0x48] sm:$0xff] %v369
    %386 = vst [vmem:[%s4 + $0x50] sm:$0xff] %v370
    %387 = vst [vmem:[%s4 + $0x58] sm:$0xff] %v371
    %388 = vst [vmem:[%s4 + $0x60] sm:$0xff] %v372
    %389 = vst [vmem:[%s4 + $0x68] sm:$0xff] %v373
    %390 = vst [vmem:[%s4 + $0x70] sm:$0xff] %v374
    %391 = vst [vmem:[%s4 + $0x78] sm:$0xff] %v375
  $region25: #{fwd.6} parent=0 // pred_fallthru
    _
  // Predicated region
  $region26: #{fwd.6} parent=0 // pred_check
    _
  $region27: #{fwd.6} parent=0 // pred_check_branch
    %393 = sbr.rel (0) target = $region29
  $region28: #{fwd.6} parent=0 // pred_region
    _
  $region29: #{fwd.6} parent=0 // pred_fallthru
    _
  // Predicated region
  $region30: #{fwd.6} parent=0 // pred_check
    _
  $region31: #{fwd.6} parent=0 // pred_check_branch
    %395 = sbr.rel (0) target = $region33
  $region32: #{fwd.6} parent=0 // pred_region
    _
  $region33: #{fwd.6} parent=0 // pred_fallthru
    _

// kernel: fwd.5
$region0: #{fwd.5}
  #allocation0 [shape = 'u32[]', space=smem, size = 0x4, offset = 0x4, fixed_abs, tag = 'smem constant byte address 0x4 - core index']
  #allocation1 [shape = 'u32[144,128]{1,0:T(1,128)}', space=vmem, size = 0x12000, scoped, tag = 'internal scratch']
  %s0 = inlined_call_operand.vmem [shape: bf16[128,128], index: 0, kind: input, shape index: {}]
  %s1 = inlined_call_operand.vmem [shape: bf16[128,128], index: 1, kind: input, shape index: {}]
  %s2 = inlined_call_operand.vmem [shape: f32[1,128], index: 2, kind: input, shape index: {}]
  %s3 = inlined_call_operand.vmem [shape: f32[1,128], index: 3, kind: input, shape index: {}]
  %s4 = inlined_call_operand.vmem [shape: f32[128,128], index: 4, kind: output, shape index: {}]
  %s5 = sld [smem:[#allocation0]]
  $region34: #{fwd.5} parent=0
    _
  %s7 = ssub.s32 1, %s5
  %s8 = scalar_select 0, %s7, %s5
  // Predicated region
  $region2: #{fwd.5} parent=0 // pred_check
    _
  $region3: #{fwd.5} parent=0 // pred_check_branch
    %10 = sbr.rel (0) target = $region5
  $region4: #{fwd.5} parent=0 // pred_region
    _
  $region5: #{fwd.5} parent=0 // pred_fallthru
    _
  // Predicated region
  $region6: #{fwd.5} parent=0 // pred_check
    _
  $region7: #{fwd.5} parent=0 // pred_check_branch
    %12 = sbr.rel (0) target = $region9
  $region8: #{fwd.5} parent=0 // pred_region
    _
  $region9: #{fwd.5} parent=0 // pred_fallthru
    _
  // Predicated region
  $region10: #{fwd.5} parent=0 // pred_check
    _
  $region11: #{fwd.5} parent=0 // pred_check_branch
    %14 = sbr.rel (0) target = $region13
  $region12: #{fwd.5} parent=0 // pred_region
    _
  $region13: #{fwd.5} parent=0 // pred_fallthru
    _
  // Predicated region
  $region14: #{fwd.5} parent=0 // pred_check
    _
  $region15: #{fwd.5} parent=0 // pred_check_branch
    %16 = sbr.rel (0) target = $region17
  $region16: #{fwd.5} parent=0 // pred_region
    _
  $region17: #{fwd.5} parent=0 // pred_fallthru
    _
  %p18 = scmp.eq.s32.totalorder 0, 0
  // Predicated region
  $region18: #{fwd.5} parent=0 // pred_check
    %p19 = pneg %p18
  $region19: #{fwd.5} parent=0 // pred_check_branch
    %21 = sbr.rel (%p19) target = $region21
  $region20: #{fwd.5} parent=0 // pred_region
    %22 = vst [vmem:[%s4] sm:$0xff] 0.0
    %23 = vst [vmem:[%s4 + $0x8] sm:$0xff] 0.0
    %24 = vst [vmem:[%s4 + $0x10] sm:$0xff] 0.0
    %25 = vst [vmem:[%s4 + $0x18] sm:$0xff] 0.0
    %26 = vst [vmem:[%s4 + $0x20] sm:$0xff] 0.0
    %27 = vst [vmem:[%s4 + $0x28] sm:$0xff] 0.0
    %28 = vst [vmem:[%s4 + $0x30] sm:$0xff] 0.0
    %29 = vst [vmem:[%s4 + $0x38] sm:$0xff] 0.0
    %30 = vst [vmem:[%s4 + $0x40] sm:$0xff] 0.0
    %31 = vst [vmem:[%s4 + $0x48] sm:$0xff] 0.0
    %32 = vst [vmem:[%s4 + $0x50] sm:$0xff] 0.0
    %33 = vst [vmem:[%s4 + $0x58] sm:$0xff] 0.0
    %34 = vst [vmem:[%s4 + $0x60] sm:$0xff] 0.0
    %35 = vst [vmem:[%s4 + $0x68] sm:$0xff] 0.0
    %36 = vst [vmem:[%s4 + $0x70] sm:$0xff] 0.0
    %37 = vst [vmem:[%s4 + $0x78] sm:$0xff] 0.0
  $region21: #{fwd.5} parent=0 // pred_fallthru
    _
  %v38 = vld [vmem:[%s4] sm:$0xff]
  %v39 = vld [vmem:[%s4 + $0x8] sm:$0xff]
  %v40 = vld [vmem:[%s4 + $0x10] sm:$0xff]
  %v41 = vld [vmem:[%s4 + $0x18] sm:$0xff]
  %v42 = vld [vmem:[%s4 + $0x20] sm:$0xff]
  %v43 = vld [vmem:[%s4 + $0x28] sm:$0xff]
  %v44 = vld [vmem:[%s4 + $0x30] sm:$0xff]
  %v45 = vld [vmem:[%s4 + $0x38] sm:$0xff]
  %v46 = vld [vmem:[%s4 + $0x40] sm:$0xff]
  %v47 = vld [vmem:[%s4 + $0x48] sm:$0xff]
  %v48 = vld [vmem:[%s4 + $0x50] sm:$0xff]
  %v49 = vld [vmem:[%s4 + $0x58] sm:$0xff]
  %v50 = vld [vmem:[%s4 + $0x60] sm:$0xff]
  %v51 = vld [vmem:[%s4 + $0x68] sm:$0xff]
  %v52 = vld [vmem:[%s4 + $0x70] sm:$0xff]
  %v53 = vld [vmem:[%s4 + $0x78] sm:$0xff]
  %v54 = vld [vmem:[%s0] sm:$0xf]
  %v55 = vld [vmem:[%s0 + $0x4] sm:$0xf]
  %v56 = vld [vmem:[%s0 + $0x8] sm:$0xf]
  %v57 = vld [vmem:[%s0 + $0xc] sm:$0xf]
  %v58 = vld [vmem:[%s0 + $0x10] sm:$0xf]
  %v59 = vld [vmem:[%s0 + $0x14] sm:$0xf]
  %v60 = vld [vmem:[%s0 + $0x18] sm:$0xf]
  %v61 = vld [vmem:[%s0 + $0x1c] sm:$0xf]
  %v62 = vld [vmem:[%s0 + $0x20] sm:$0xf]
  %v63 = vld [vmem:[%s0 + $0x24] sm:$0xf]
  %v64 = vld [vmem:[%s0 + $0x28] sm:$0xf]
  %v65 = vld [vmem:[%s0 + $0x2c] sm:$0xf]
  %v66 = vld [vmem:[%s0 + $0x30] sm:$0xf]
  %v67 = vld [vmem:[%s0 + $0x34] sm:$0xf]
  %v68 = vld [vmem:[%s0 + $0x38] sm:$0xf]
  %v69 = vld [vmem:[%s0 + $0x3c] sm:$0xf]
  %v70 = vld [vmem:[%s1] sm:$0xf]
  %v71 = vld [vmem:[%s1 + $0x4] sm:$0xf]
  %v72 = vld [vmem:[%s1 + $0x8] sm:$0xf]
  %v73 = vld [vmem:[%s1 + $0xc] sm:$0xf]
  %v74 = vld [vmem:[%s1 + $0x10] sm:$0xf]
  %v75 = vld [vmem:[%s1 + $0x14] sm:$0xf]
  %v76 = vld [vmem:[%s1 + $0x18] sm:$0xf]
  %v77 = vld [vmem:[%s1 + $0x1c] sm:$0xf]
  %v78 = vld [vmem:[%s1 + $0x20] sm:$0xf]
  %v79 = vld [vmem:[%s1 + $0x24] sm:$0xf]
  %v80 = vld [vmem:[%s1 + $0x28] sm:$0xf]
  %v81 = vld [vmem:[%s1 + $0x2c] sm:$0xf]
  %v82 = vld [vmem:[%s1 + $0x30] sm:$0xf]
  %v83 = vld [vmem:[%s1 + $0x34] sm:$0xf]
  %v84 = vld [vmem:[%s1 + $0x38] sm:$0xf]
  %v85 = vld [vmem:[%s1 + $0x3c] sm:$0xf]
  %v102 = vunpack.c.l.b16 %v54
  %v103 = vunpack.c.l.b16 %v55
  %v104 = vunpack.c.l.b16 %v56
  %v105 = vunpack.c.l.b16 %v57
  %v106 = vunpack.c.l.b16 %v58
  %v107 = vunpack.c.l.b16 %v59
  %v108 = vunpack.c.l.b16 %v60
  %v109 = vunpack.c.l.b16 %v61
  %v110 = vunpack.c.l.b16 %v62
  %v111 = vunpack.c.l.b16 %v63
  %v112 = vunpack.c.l.b16 %v64
  %v113 = vunpack.c.l.b16 %v65
  %v114 = vunpack.c.l.b16 %v66
  %v115 = vunpack.c.l.b16 %v67
  %v116 = vunpack.c.l.b16 %v68
  %v117 = vunpack.c.l.b16 %v69
  %v118 = vpack.c.b16 %v103, %v102
  %v119 = vpack.c.b16 %v105, %v104
  %v120 = vpack.c.b16 %v107, %v106
  %v121 = vpack.c.b16 %v109, %v108
  %v122 = vpack.c.b16 %v111, %v110
  %v123 = vpack.c.b16 %v113, %v112
  %v124 = vpack.c.b16 %v115, %v114
  %v125 = vpack.c.b16 %v117, %v116
  %v150 = vunpack.c.l.b16 %v70
  %v151 = vunpack.c.l.b16 %v71
  %v152 = vunpack.c.l.b16 %v72
  %v153 = vunpack.c.l.b16 %v73
  %v154 = vunpack.c.l.b16 %v74
  %v155 = vunpack.c.l.b16 %v75
  %v156 = vunpack.c.l.b16 %v76
  %v157 = vunpack.c.l.b16 %v77
  %v158 = vunpack.c.l.b16 %v78
  %v159 = vunpack.c.l.b16 %v79
  %v160 = vunpack.c.l.b16 %v80
  %v161 = vunpack.c.l.b16 %v81
  %v162 = vunpack.c.l.b16 %v82
  %v163 = vunpack.c.l.b16 %v83
  %v164 = vunpack.c.l.b16 %v84
  %v165 = vunpack.c.l.b16 %v85
  %v166 = vpack.c.b16 %v151, %v150
  %v167 = vpack.c.b16 %v153, %v152
  %v168 = vpack.c.b16 %v155, %v154
  %v169 = vpack.c.b16 %v157, %v156
  %v170 = vpack.c.b16 %v159, %v158
  %v171 = vpack.c.b16 %v161, %v160
  %v172 = vpack.c.b16 %v163, %v162
  %v173 = vpack.c.b16 %v165, %v164
  %182 = vmatprep.subr.bf16.mxu0 0
  %183 = vmatpush1.bf16.msra.mxu0 %v173
  %184 = vmatprep.subr.bf16.mxu0 0
  %185 = vmatpush1.bf16.msra.mxu0 %v172
  %186 = vmatprep.subr.bf16.mxu0 0
  %187 = vmatpush1.bf16.msra.mxu0 %v171
  %188 = vmatprep.subr.bf16.mxu0 0
  %189 = vmatpush1.bf16.msra.mxu0 %v170
  %190 = vmatprep.subr.bf16.mxu0 0
  %191 = vmatpush1.bf16.msra.mxu0 %v169
  %192 = vmatprep.subr.bf16.mxu0 0
  %193 = vmatpush1.bf16.msra.mxu0 %v168
  %194 = vmatprep.subr.bf16.mxu0 0
  %195 = vmatpush1.bf16.msra.mxu0 %v167
  %196 = vmatprep.subr.bf16.mxu0 0
  %197 = vmatpush1.bf16.msra.mxu0 %v166
  %198 = vmatprep.subr.bf16.mxu0 0
  %199 = vmatpush2.bf16.msra.mxu0 0
  %200 = vmatprep.subr.bf16.mxu0 0
  %201 = vmatpush2.bf16.msra.mxu0 0
  %202 = vmatprep.subr.bf16.mxu0 0
  %203 = vmatpush2.bf16.msra.mxu0 0
  %204 = vmatprep.subr.bf16.mxu0 0
  %205 = vmatpush2.bf16.msra.mxu0 0
  %206 = vmatprep.subr.bf16.mxu0 0
  %207 = vmatpush2.bf16.msra.mxu0 0
  %208 = vmatprep.subr.bf16.mxu0 0
  %209 = vmatpush2.bf16.msra.mxu0 0
  %210 = vmatprep.subr.bf16.mxu0 0
  %211 = vmatpush2.bf16.msra.mxu0 0
  %212 = vmatprep.subr.bf16.mxu0 0
  %213 = vmatpush2.bf16.msra.mxu0 0
  %214 = vmatprep.mubr.bf16.mxu0 0
  %215 = vmatmul.mubr.bf16.gmra.mxu0 %v118
  %v216 = vpop.f32.mrf.mxu0
  %v217 = vadd.f32 0.0, %v216
  %v218 = vpop.f32.mrf.mxu0
  %v219 = vpop.f32.mrf.mxu0
  %v220 = vadd.f32 0.0, %v219
  %v221 = vpop.f32.mrf.mxu0
  %222 = vmatprep.mubr.bf16.mxu0 0
  %223 = vmatmul.mubr.bf16.gmra.mxu0 %v119
  %v224 = vpop.f32.mrf.mxu0
  %v225 = vadd.f32 0.0, %v224
  %v226 = vpop.f32.mrf.mxu0
  %v227 = vpop.f32.mrf.mxu0
  %v228 = vadd.f32 0.0, %v227
  %v229 = vpop.f32.mrf.mxu0
  %230 = vmatprep.mubr.bf16.mxu0 0
  %231 = vmatmul.mubr.bf16.gmra.mxu0 %v120
  %v232 = vpop.f32.mrf.mxu0
  %v233 = vadd.f32 0.0, %v232
  %v234 = vpop.f32.mrf.mxu0
  %v235 = vpop.f32.mrf.mxu0
  %v236 = vadd.f32 0.0, %v235
  %v237 = vpop.f32.mrf.mxu0
  %238 = vmatprep.mubr.bf16.mxu0 0
  %239 = vmatmul.mubr.bf16.gmra.mxu0 %v121
  %v240 = vpop.f32.mrf.mxu0
  %v241 = vadd.f32 0.0, %v240
  %v242 = vpop.f32.mrf.mxu0
  %v243 = vpop.f32.mrf.mxu0
  %v244 = vadd.f32 0.0, %v243
  %v245 = vpop.f32.mrf.mxu0
  %246 = vmatprep.mubr.bf16.mxu0 0
  %247 = vmatmul.mubr.bf16.gmra.mxu0 %v122
  %v248 = vpop.f32.mrf.mxu0
  %v249 = vadd.f32 0.0, %v248
  %v250 = vpop.f32.mrf.mxu0
  %v251 = vpop.f32.mrf.mxu0
  %v252 = vadd.f32 0.0, %v251
  %v253 = vpop.f32.mrf.mxu0
  %254 = vmatprep.mubr.bf16.mxu0 0
  %255 = vmatmul.mubr.bf16.gmra.mxu0 %v123
  %v256 = vpop.f32.mrf.mxu0
  %v257 = vadd.f32 0.0, %v256
  %v258 = vpop.f32.mrf.mxu0
  %v259 = vpop.f32.mrf.mxu0
  %v260 = vadd.f32 0.0, %v259
  %v261 = vpop.f32.mrf.mxu0
  %262 = vmatprep.mubr.bf16.mxu0 0
  %263 = vmatmul.mubr.bf16.gmra.mxu0 %v124
  %v264 = vpop.f32.mrf.mxu0
  %v265 = vadd.f32 0.0, %v264
  %v266 = vpop.f32.mrf.mxu0
  %v267 = vpop.f32.mrf.mxu0
  %v268 = vadd.f32 0.0, %v267
  %v269 = vpop.f32.mrf.mxu0
  %270 = vmatprep.mubr.bf16.mxu0 0
  %271 = vmatmul.mubr.bf16.gmra.mxu0 %v125
  %v272 = vpop.f32.mrf.mxu0
  %v273 = vadd.f32 0.0, %v272
  %v274 = vpop.f32.mrf.mxu0
  %v275 = vpop.f32.mrf.mxu0
  %v276 = vadd.f32 0.0, %v275
  %v277 = vpop.f32.mrf.mxu0
  %278 = vdwg.mxu0
  %v279 = vadd.f32 %v38, %v217
  %v280 = vadd.f32 %v39, %v220
  %v281 = vadd.f32 %v40, %v225
  %v282 = vadd.f32 %v41, %v228
  %v283 = vadd.f32 %v42, %v233
  %v284 = vadd.f32 %v43, %v236
  %v285 = vadd.f32 %v44, %v241
  %v286 = vadd.f32 %v45, %v244
  %v287 = vadd.f32 %v46, %v249
  %v288 = vadd.f32 %v47, %v252
  %v289 = vadd.f32 %v48, %v257
  %v290 = vadd.f32 %v49, %v260
  %v291 = vadd.f32 %v50, %v265
  %v292 = vadd.f32 %v51, %v268
  %v293 = vadd.f32 %v52, %v273
  %v294 = vadd.f32 %v53, %v276
  %295 = vst [vmem:[%s4] sm:$0xff] %v279
  %296 = vst [vmem:[%s4 + $0x8] sm:$0xff] %v280
  %297 = vst [vmem:[%s4 + $0x10] sm:$0xff] %v281
  %298 = vst [vmem:[%s4 + $0x18] sm:$0xff] %v282
  %299 = vst [vmem:[%s4 + $0x20] sm:$0xff] %v283
  %300 = vst [vmem:[%s4 + $0x28] sm:$0xff] %v284
  %301 = vst [vmem:[%s4 + $0x30] sm:$0xff] %v285
  %302 = vst [vmem:[%s4 + $0x38] sm:$0xff] %v286
  %303 = vst [vmem:[%s4 + $0x40] sm:$0xff] %v287
  %304 = vst [vmem:[%s4 + $0x48] sm:$0xff] %v288
  %305 = vst [vmem:[%s4 + $0x50] sm:$0xff] %v289
  %306 = vst [vmem:[%s4 + $0x58] sm:$0xff] %v290
  %307 = vst [vmem:[%s4 + $0x60] sm:$0xff] %v291
  %308 = vst [vmem:[%s4 + $0x68] sm:$0xff] %v292
  %309 = vst [vmem:[%s4 + $0x70] sm:$0xff] %v293
  %310 = vst [vmem:[%s4 + $0x78] sm:$0xff] %v294
  // Predicated region
  $region22: #{fwd.5} parent=0 // pred_check
    %p311 = pneg %p18
  $region23: #{fwd.5} parent=0 // pred_check_branch
    %313 = sbr.rel (%p311) target = $region25
  $region24: #{fwd.5} parent=0 // pred_region
    %v314 = vld [vmem:[%s4] sm:$0xff]
    %v315 = vld [vmem:[%s4 + $0x8] sm:$0xff]
    %v316 = vld [vmem:[%s4 + $0x10] sm:$0xff]
    %v317 = vld [vmem:[%s4 + $0x18] sm:$0xff]
    %v318 = vld [vmem:[%s4 + $0x20] sm:$0xff]
    %v319 = vld [vmem:[%s4 + $0x28] sm:$0xff]
    %v320 = vld [vmem:[%s4 + $0x30] sm:$0xff]
    %v321 = vld [vmem:[%s4 + $0x38] sm:$0xff]
    %v322 = vld [vmem:[%s4 + $0x40] sm:$0xff]
    %v323 = vld [vmem:[%s4 + $0x48] sm:$0xff]
    %v324 = vld [vmem:[%s4 + $0x50] sm:$0xff]
    %v325 = vld [vmem:[%s4 + $0x58] sm:$0xff]
    %v326 = vld [vmem:[%s4 + $0x60] sm:$0xff]
    %v327 = vld [vmem:[%s4 + $0x68] sm:$0xff]
    %v328 = vld [vmem:[%s4 + $0x70] sm:$0xff]
    %v329 = vld [vmem:[%s4 + $0x78] sm:$0xff]
    %v330 = vld [vmem:[%s2] sm:$0x1]
    %v332 = vlaneseq
    %v333 = vshrl.u32 %v332, 7
    %v334 = vsub.s32 0, %v333
    %v335 = vrot.slane %v330, %v334
    %v337 = vmul.f32 %v314, %v335
    %v338 = vmul.f32 %v315, %v335
    %v339 = vmul.f32 %v316, %v335
    %v340 = vmul.f32 %v317, %v335
    %v341 = vmul.f32 %v318, %v335
    %v342 = vmul.f32 %v319, %v335
    %v343 = vmul.f32 %v320, %v335
    %v344 = vmul.f32 %v321, %v335
    %v345 = vmul.f32 %v322, %v335
    %v346 = vmul.f32 %v323, %v335
    %v347 = vmul.f32 %v324, %v335
    %v348 = vmul.f32 %v325, %v335
    %v349 = vmul.f32 %v326, %v335
    %v350 = vmul.f32 %v327, %v335
    %v351 = vmul.f32 %v328, %v335
    %v352 = vmul.f32 %v329, %v335
    %v353 = vld [vmem:[%s3] sm:$0x1]
    %v355 = vlaneseq
    %v356 = vshrl.u32 %v355, 7
    %v357 = vsub.s32 0, %v356
    %v358 = vrot.slane %v353, %v357
    %v360 = vadd.f32 %v337, %v358
    %v361 = vadd.f32 %v338, %v358
    %v362 = vadd.f32 %v339, %v358
    %v363 = vadd.f32 %v340, %v358
    %v364 = vadd.f32 %v341, %v358
    %v365 = vadd.f32 %v342, %v358
    %v366 = vadd.f32 %v343, %v358
    %v367 = vadd.f32 %v344, %v358
    %v368 = vadd.f32 %v345, %v358
    %v369 = vadd.f32 %v346, %v358
    %v370 = vadd.f32 %v347, %v358
    %v371 = vadd.f32 %v348, %v358
    %v372 = vadd.f32 %v349, %v358
    %v373 = vadd.f32 %v350, %v358
    %v374 = vadd.f32 %v351, %v358
    %v375 = vadd.f32 %v352, %v358
    %v376 = vmax.f32 %v360, 0.0
    %v377 = vmax.f32 %v361, 0.0
    %v378 = vmax.f32 %v362, 0.0
    %v379 = vmax.f32 %v363, 0.0
    %v380 = vmax.f32 %v364, 0.0
    %v381 = vmax.f32 %v365, 0.0
    %v382 = vmax.f32 %v366, 0.0
    %v383 = vmax.f32 %v367, 0.0
    %v384 = vmax.f32 %v368, 0.0
    %v385 = vmax.f32 %v369, 0.0
    %v386 = vmax.f32 %v370, 0.0
    %v387 = vmax.f32 %v371, 0.0
    %v388 = vmax.f32 %v372, 0.0
    %v389 = vmax.f32 %v373, 0.0
    %v390 = vmax.f32 %v374, 0.0
    %v391 = vmax.f32 %v375, 0.0
    %392 = vst [vmem:[%s4] sm:$0xff] %v376
    %393 = vst [vmem:[%s4 + $0x8] sm:$0xff] %v377
    %394 = vst [vmem:[%s4 + $0x10] sm:$0xff] %v378
    %395 = vst [vmem:[%s4 + $0x18] sm:$0xff] %v379
    %396 = vst [vmem:[%s4 + $0x20] sm:$0xff] %v380
    %397 = vst [vmem:[%s4 + $0x28] sm:$0xff] %v381
    %398 = vst [vmem:[%s4 + $0x30] sm:$0xff] %v382
    %399 = vst [vmem:[%s4 + $0x38] sm:$0xff] %v383
    %400 = vst [vmem:[%s4 + $0x40] sm:$0xff] %v384
    %401 = vst [vmem:[%s4 + $0x48] sm:$0xff] %v385
    %402 = vst [vmem:[%s4 + $0x50] sm:$0xff] %v386
    %403 = vst [vmem:[%s4 + $0x58] sm:$0xff] %v387
    %404 = vst [vmem:[%s4 + $0x60] sm:$0xff] %v388
    %405 = vst [vmem:[%s4 + $0x68] sm:$0xff] %v389
    %406 = vst [vmem:[%s4 + $0x70] sm:$0xff] %v390
    %407 = vst [vmem:[%s4 + $0x78] sm:$0xff] %v391
  $region25: #{fwd.5} parent=0 // pred_fallthru
    _
  // Predicated region
  $region26: #{fwd.5} parent=0 // pred_check
    _
  $region27: #{fwd.5} parent=0 // pred_check_branch
    %409 = sbr.rel (0) target = $region29
  $region28: #{fwd.5} parent=0 // pred_region
    _
  $region29: #{fwd.5} parent=0 // pred_fallthru
    _
  // Predicated region
  $region30: #{fwd.5} parent=0 // pred_check
    _
  $region31: #{fwd.5} parent=0 // pred_check_branch
    %411 = sbr.rel (0) target = $region33
  $region32: #{fwd.5} parent=0 // pred_region
    _
  $region33: #{fwd.5} parent=0 // pred_fallthru
    _

// kernel: fwd.7
$region0: #{fwd.7}
  #allocation0 [shape = 'u32[]', space=smem, size = 0x4, offset = 0x4, fixed_abs, tag = 'smem constant byte address 0x4 - core index']
  #allocation1 [shape = 'u32[144,128]{1,0:T(1,128)}', space=vmem, size = 0x12000, scoped, tag = 'internal scratch']
  %s0 = inlined_call_operand.vmem [shape: bf16[128,128], index: 0, kind: input, shape index: {}]
  %s1 = inlined_call_operand.vmem [shape: bf16[128,128], index: 1, kind: input, shape index: {}]
  %s2 = inlined_call_operand.vmem [shape: f32[1,128], index: 2, kind: input, shape index: {}]
  %s3 = inlined_call_operand.vmem [shape: f32[1,128], index: 3, kind: input, shape index: {}]
  %s4 = inlined_call_operand.vmem [shape: f32[128,128], index: 4, kind: input, shape index: {}]
  %s5 = inlined_call_operand.vmem [shape: f32[128,128], index: 5, kind: output, shape index: {}]
  %s6 = sld [smem:[#allocation0]]
  $region38: #{fwd.7} parent=0
    _
  %s8 = ssub.s32 1, %s6
  %s9 = scalar_select 0, %s8, %s6
  // Predicated region
  $region2: #{fwd.7} parent=0 // pred_check
    _
  $region3: #{fwd.7} parent=0 // pred_check_branch
    %11 = sbr.rel (0) target = $region5
  $region4: #{fwd.7} parent=0 // pred_region
    _
  $region5: #{fwd.7} parent=0 // pred_fallthru
    _
  // Predicated region
  $region6: #{fwd.7} parent=0 // pred_check
    _
  $region7: #{fwd.7} parent=0 // pred_check_branch
    %13 = sbr.rel (0) target = $region9
  $region8: #{fwd.7} parent=0 // pred_region
    _
  $region9: #{fwd.7} parent=0 // pred_fallthru
    _
  // Predicated region
  $region10: #{fwd.7} parent=0 // pred_check
    _
  $region11: #{fwd.7} parent=0 // pred_check_branch
    %15 = sbr.rel (0) target = $region13
  $region12: #{fwd.7} parent=0 // pred_region
    _
  $region13: #{fwd.7} parent=0 // pred_fallthru
    _
  // Predicated region
  $region14: #{fwd.7} parent=0 // pred_check
    _
  $region15: #{fwd.7} parent=0 // pred_check_branch
    %17 = sbr.rel (0) target = $region17
  $region16: #{fwd.7} parent=0 // pred_region
    _
  $region17: #{fwd.7} parent=0 // pred_fallthru
    _
  // Predicated region
  $region18: #{fwd.7} parent=0 // pred_check
    _
  $region19: #{fwd.7} parent=0 // pred_check_branch
    %19 = sbr.rel (0) target = $region21
  $region20: #{fwd.7} parent=0 // pred_region
    _
  $region21: #{fwd.7} parent=0 // pred_fallthru
    _
  %p21 = scmp.eq.s32.totalorder 0, 0
  // Predicated region
  $region22: #{fwd.7} parent=0 // pred_check
    %p22 = pneg %p21
  $region23: #{fwd.7} parent=0 // pred_check_branch
    %24 = sbr.rel (%p22) target = $region25
  $region24: #{fwd.7} parent=0 // pred_region
    %25 = vst [vmem:[%s5] sm:$0xff] 0.0
    %26 = vst [vmem:[%s5 + $0x8] sm:$0xff] 0.0
    %27 = vst [vmem:[%s5 + $0x10] sm:$0xff] 0.0
    %28 = vst [vmem:[%s5 + $0x18] sm:$0xff] 0.0
    %29 = vst [vmem:[%s5 + $0x20] sm:$0xff] 0.0
    %30 = vst [vmem:[%s5 + $0x28] sm:$0xff] 0.0
    %31 = vst [vmem:[%s5 + $0x30] sm:$0xff] 0.0
    %32 = vst [vmem:[%s5 + $0x38] sm:$0xff] 0.0
    %33 = vst [vmem:[%s5 + $0x40] sm:$0xff] 0.0
    %34 = vst [vmem:[%s5 + $0x48] sm:$0xff] 0.0
    %35 = vst [vmem:[%s5 + $0x50] sm:$0xff] 0.0
    %36 = vst [vmem:[%s5 + $0x58] sm:$0xff] 0.0
    %37 = vst [vmem:[%s5 + $0x60] sm:$0xff] 0.0
    %38 = vst [vmem:[%s5 + $0x68] sm:$0xff] 0.0
    %39 = vst [vmem:[%s5 + $0x70] sm:$0xff] 0.0
    %40 = vst [vmem:[%s5 + $0x78] sm:$0xff] 0.0
  $region25: #{fwd.7} parent=0 // pred_fallthru
    _
  %v41 = vld [vmem:[%s5] sm:$0xff]
  %v42 = vld [vmem:[%s5 + $0x8] sm:$0xff]
  %v43 = vld [vmem:[%s5 + $0x10] sm:$0xff]
  %v44 = vld [vmem:[%s5 + $0x18] sm:$0xff]
  %v45 = vld [vmem:[%s5 + $0x20] sm:$0xff]
  %v46 = vld [vmem:[%s5 + $0x28] sm:$0xff]
  %v47 = vld [vmem:[%s5 + $0x30] sm:$0xff]
  %v48 = vld [vmem:[%s5 + $0x38] sm:$0xff]
  %v49 = vld [vmem:[%s5 + $0x40] sm:$0xff]
  %v50 = vld [vmem:[%s5 + $0x48] sm:$0xff]
  %v51 = vld [vmem:[%s5 + $0x50] sm:$0xff]
  %v52 = vld [vmem:[%s5 + $0x58] sm:$0xff]
  %v53 = vld [vmem:[%s5 + $0x60] sm:$0xff]
  %v54 = vld [vmem:[%s5 + $0x68] sm:$0xff]
  %v55 = vld [vmem:[%s5 + $0x70] sm:$0xff]
  %v56 = vld [vmem:[%s5 + $0x78] sm:$0xff]
  %v57 = vld [vmem:[%s0] sm:$0xf]
  %v58 = vld [vmem:[%s0 + $0x4] sm:$0xf]
  %v59 = vld [vmem:[%s0 + $0x8] sm:$0xf]
  %v60 = vld [vmem:[%s0 + $0xc] sm:$0xf]
  %v61 = vld [vmem:[%s0 + $0x10] sm:$0xf]
  %v62 = vld [vmem:[%s0 + $0x14] sm:$0xf]
  %v63 = vld [vmem:[%s0 + $0x18] sm:$0xf]
  %v64 = vld [vmem:[%s0 + $0x1c] sm:$0xf]
  %v65 = vld [vmem:[%s0 + $0x20] sm:$0xf]
  %v66 = vld [vmem:[%s0 + $0x24] sm:$0xf]
  %v67 = vld [vmem:[%s0 + $0x28] sm:$0xf]
  %v68 = vld [vmem:[%s0 + $0x2c] sm:$0xf]
  %v69 = vld [vmem:[%s0 + $0x30] sm:$0xf]
  %v70 = vld [vmem:[%s0 + $0x34] sm:$0xf]
  %v71 = vld [vmem:[%s0 + $0x38] sm:$0xf]
  %v72 = vld [vmem:[%s0 + $0x3c] sm:$0xf]
  %v73 = vld [vmem:[%s1] sm:$0xf]
  %v74 = vld [vmem:[%s1 + $0x4] sm:$0xf]
  %v75 = vld [vmem:[%s1 + $0x8] sm:$0xf]
  %v76 = vld [vmem:[%s1 + $0xc] sm:$0xf]
  %v77 = vld [vmem:[%s1 + $0x10] sm:$0xf]
  %v78 = vld [vmem:[%s1 + $0x14] sm:$0xf]
  %v79 = vld [vmem:[%s1 + $0x18] sm:$0xf]
  %v80 = vld [vmem:[%s1 + $0x1c] sm:$0xf]
  %v81 = vld [vmem:[%s1 + $0x20] sm:$0xf]
  %v82 = vld [vmem:[%s1 + $0x24] sm:$0xf]
  %v83 = vld [vmem:[%s1 + $0x28] sm:$0xf]
  %v84 = vld [vmem:[%s1 + $0x2c] sm:$0xf]
  %v85 = vld [vmem:[%s1 + $0x30] sm:$0xf]
  %v86 = vld [vmem:[%s1 + $0x34] sm:$0xf]
  %v87 = vld [vmem:[%s1 + $0x38] sm:$0xf]
  %v88 = vld [vmem:[%s1 + $0x3c] sm:$0xf]
  %v105 = vunpack.c.l.b16 %v57
  %v106 = vunpack.c.l.b16 %v58
  %v107 = vunpack.c.l.b16 %v59
  %v108 = vunpack.c.l.b16 %v60
  %v109 = vunpack.c.l.b16 %v61
  %v110 = vunpack.c.l.b16 %v62
  %v111 = vunpack.c.l.b16 %v63
  %v112 = vunpack.c.l.b16 %v64
  %v113 = vunpack.c.l.b16 %v65
  %v114 = vunpack.c.l.b16 %v66
  %v115 = vunpack.c.l.b16 %v67
  %v116 = vunpack.c.l.b16 %v68
  %v117 = vunpack.c.l.b16 %v69
  %v118 = vunpack.c.l.b16 %v70
  %v119 = vunpack.c.l.b16 %v71
  %v120 = vunpack.c.l.b16 %v72
  %v121 = vpack.c.b16 %v106, %v105
  %v122 = vpack.c.b16 %v108, %v107
  %v123 = vpack.c.b16 %v110, %v109
  %v124 = vpack.c.b16 %v112, %v111
  %v125 = vpack.c.b16 %v114, %v113
  %v126 = vpack.c.b16 %v116, %v115
  %v127 = vpack.c.b16 %v118, %v117
  %v128 = vpack.c.b16 %v120, %v119
  %v153 = vunpack.c.l.b16 %v73
  %v154 = vunpack.c.l.b16 %v74
  %v155 = vunpack.c.l.b16 %v75
  %v156 = vunpack.c.l.b16 %v76
  %v157 = vunpack.c.l.b16 %v77
  %v158 = vunpack.c.l.b16 %v78
  %v159 = vunpack.c.l.b16 %v79
  %v160 = vunpack.c.l.b16 %v80
  %v161 = vunpack.c.l.b16 %v81
  %v162 = vunpack.c.l.b16 %v82
  %v163 = vunpack.c.l.b16 %v83
  %v164 = vunpack.c.l.b16 %v84
  %v165 = vunpack.c.l.b16 %v85
  %v166 = vunpack.c.l.b16 %v86
  %v167 = vunpack.c.l.b16 %v87
  %v168 = vunpack.c.l.b16 %v88
  %v169 = vpack.c.b16 %v154, %v153
  %v170 = vpack.c.b16 %v156, %v155
  %v171 = vpack.c.b16 %v158, %v157
  %v172 = vpack.c.b16 %v160, %v159
  %v173 = vpack.c.b16 %v162, %v161
  %v174 = vpack.c.b16 %v164, %v163
  %v175 = vpack.c.b16 %v166, %v165
  %v176 = vpack.c.b16 %v168, %v167
  %185 = vmatprep.subr.bf16.mxu0 0
  %186 = vmatpush1.bf16.msra.mxu0 %v176
  %187 = vmatprep.subr.bf16.mxu0 0
  %188 = vmatpush1.bf16.msra.mxu0 %v175
  %189 = vmatprep.subr.bf16.mxu0 0
  %190 = vmatpush1.bf16.msra.mxu0 %v174
  %191 = vmatprep.subr.bf16.mxu0 0
  %192 = vmatpush1.bf16.msra.mxu0 %v173
  %193 = vmatprep.subr.bf16.mxu0 0
  %194 = vmatpush1.bf16.msra.mxu0 %v172
  %195 = vmatprep.subr.bf16.mxu0 0
  %196 = vmatpush1.bf16.msra.mxu0 %v171
  %197 = vmatprep.subr.bf16.mxu0 0
  %198 = vmatpush1.bf16.msra.mxu0 %v170
  %199 = vmatprep.subr.bf16.mxu0 0
  %200 = vmatpush1.bf16.msra.mxu0 %v169
  %201 = vmatprep.subr.bf16.mxu0 0
  %202 = vmatpush2.bf16.msra.mxu0 0
  %203 = vmatprep.subr.bf16.mxu0 0
  %204 = vmatpush2.bf16.msra.mxu0 0
  %205 = vmatprep.subr.bf16.mxu0 0
  %206 = vmatpush2.bf16.msra.mxu0 0
  %207 = vmatprep.subr.bf16.mxu0 0
  %208 = vmatpush2.bf16.msra.mxu0 0
  %209 = vmatprep.subr.bf16.mxu0 0
  %210 = vmatpush2.bf16.msra.mxu0 0
  %211 = vmatprep.subr.bf16.mxu0 0
  %212 = vmatpush2.bf16.msra.mxu0 0
  %213 = vmatprep.subr.bf16.mxu0 0
  %214 = vmatpush2.bf16.msra.mxu0 0
  %215 = vmatprep.subr.bf16.mxu0 0
  %216 = vmatpush2.bf16.msra.mxu0 0
  %217 = vmatprep.mubr.bf16.mxu0 0
  %218 = vmatmul.mubr.bf16.gmra.mxu0 %v121
  %v219 = vpop.f32.mrf.mxu0
  %v220 = vadd.f32 0.0, %v219
  %v221 = vpop.f32.mrf.mxu0
  %v222 = vpop.f32.mrf.mxu0
  %v223 = vadd.f32 0.0, %v222
  %v224 = vpop.f32.mrf.mxu0
  %225 = vmatprep.mubr.bf16.mxu0 0
  %226 = vmatmul.mubr.bf16.gmra.mxu0 %v122
  %v227 = vpop.f32.mrf.mxu0
  %v228 = vadd.f32 0.0, %v227
  %v229 = vpop.f32.mrf.mxu0
  %v230 = vpop.f32.mrf.mxu0
  %v231 = vadd.f32 0.0, %v230
  %v232 = vpop.f32.mrf.mxu0
  %233 = vmatprep.mubr.bf16.mxu0 0
  %234 = vmatmul.mubr.bf16.gmra.mxu0 %v123
  %v235 = vpop.f32.mrf.mxu0
  %v236 = vadd.f32 0.0, %v235
  %v237 = vpop.f32.mrf.mxu0
  %v238 = vpop.f32.mrf.mxu0
  %v239 = vadd.f32 0.0, %v238
  %v240 = vpop.f32.mrf.mxu0
  %241 = vmatprep.mubr.bf16.mxu0 0
  %242 = vmatmul.mubr.bf16.gmra.mxu0 %v124
  %v243 = vpop.f32.mrf.mxu0
  %v244 = vadd.f32 0.0, %v243
  %v245 = vpop.f32.mrf.mxu0
  %v246 = vpop.f32.mrf.mxu0
  %v247 = vadd.f32 0.0, %v246
  %v248 = vpop.f32.mrf.mxu0
  %249 = vmatprep.mubr.bf16.mxu0 0
  %250 = vmatmul.mubr.bf16.gmra.mxu0 %v125
  %v251 = vpop.f32.mrf.mxu0
  %v252 = vadd.f32 0.0, %v251
  %v253 = vpop.f32.mrf.mxu0
  %v254 = vpop.f32.mrf.mxu0
  %v255 = vadd.f32 0.0, %v254
  %v256 = vpop.f32.mrf.mxu0
  %257 = vmatprep.mubr.bf16.mxu0 0
  %258 = vmatmul.mubr.bf16.gmra.mxu0 %v126
  %v259 = vpop.f32.mrf.mxu0
  %v260 = vadd.f32 0.0, %v259
  %v261 = vpop.f32.mrf.mxu0
  %v262 = vpop.f32.mrf.mxu0
  %v263 = vadd.f32 0.0, %v262
  %v264 = vpop.f32.mrf.mxu0
  %265 = vmatprep.mubr.bf16.mxu0 0
  %266 = vmatmul.mubr.bf16.gmra.mxu0 %v127
  %v267 = vpop.f32.mrf.mxu0
  %v268 = vadd.f32 0.0, %v267
  %v269 = vpop.f32.mrf.mxu0
  %v270 = vpop.f32.mrf.mxu0
  %v271 = vadd.f32 0.0, %v270
  %v272 = vpop.f32.mrf.mxu0
  %273 = vmatprep.mubr.bf16.mxu0 0
  %274 = vmatmul.mubr.bf16.gmra.mxu0 %v128
  %v275 = vpop.f32.mrf.mxu0
  %v276 = vadd.f32 0.0, %v275
  %v277 = vpop.f32.mrf.mxu0
  %v278 = vpop.f32.mrf.mxu0
  %v279 = vadd.f32 0.0, %v278
  %v280 = vpop.f32.mrf.mxu0
  %281 = vdwg.mxu0
  %v282 = vadd.f32 %v41, %v220
  %v283 = vadd.f32 %v42, %v223
  %v284 = vadd.f32 %v43, %v228
  %v285 = vadd.f32 %v44, %v231
  %v286 = vadd.f32 %v45, %v236
  %v287 = vadd.f32 %v46, %v239
  %v288 = vadd.f32 %v47, %v244
  %v289 = vadd.f32 %v48, %v247
  %v290 = vadd.f32 %v49, %v252
  %v291 = vadd.f32 %v50, %v255
  %v292 = vadd.f32 %v51, %v260
  %v293 = vadd.f32 %v52, %v263
  %v294 = vadd.f32 %v53, %v268
  %v295 = vadd.f32 %v54, %v271
  %v296 = vadd.f32 %v55, %v276
  %v297 = vadd.f32 %v56, %v279
  %298 = vst [vmem:[%s5] sm:$0xff] %v282
  %299 = vst [vmem:[%s5 + $0x8] sm:$0xff] %v283
  %300 = vst [vmem:[%s5 + $0x10] sm:$0xff] %v284
  %301 = vst [vmem:[%s5 + $0x18] sm:$0xff] %v285
  %302 = vst [vmem:[%s5 + $0x20] sm:$0xff] %v286
  %303 = vst [vmem:[%s5 + $0x28] sm:$0xff] %v287
  %304 = vst [vmem:[%s5 + $0x30] sm:$0xff] %v288
  %305 = vst [vmem:[%s5 + $0x38] sm:$0xff] %v289
  %306 = vst [vmem:[%s5 + $0x40] sm:$0xff] %v290
  %307 = vst [vmem:[%s5 + $0x48] sm:$0xff] %v291
  %308 = vst [vmem:[%s5 + $0x50] sm:$0xff] %v292
  %309 = vst [vmem:[%s5 + $0x58] sm:$0xff] %v293
  %310 = vst [vmem:[%s5 + $0x60] sm:$0xff] %v294
  %311 = vst [vmem:[%s5 + $0x68] sm:$0xff] %v295
  %312 = vst [vmem:[%s5 + $0x70] sm:$0xff] %v296
  %313 = vst [vmem:[%s5 + $0x78] sm:$0xff] %v297
  // Predicated region
  $region26: #{fwd.7} parent=0 // pred_check
    %p314 = pneg %p21
  $region27: #{fwd.7} parent=0 // pred_check_branch
    %316 = sbr.rel (%p314) target = $region29
  $region28: #{fwd.7} parent=0 // pred_region
    %v317 = vld [vmem:[%s5] sm:$0xff]
    %v318 = vld [vmem:[%s5 + $0x8] sm:$0xff]
    %v319 = vld [vmem:[%s5 + $0x10] sm:$0xff]
    %v320 = vld [vmem:[%s5 + $0x18] sm:$0xff]
    %v321 = vld [vmem:[%s5 + $0x20] sm:$0xff]
    %v322 = vld [vmem:[%s5 + $0x28] sm:$0xff]
    %v323 = vld [vmem:[%s5 + $0x30] sm:$0xff]
    %v324 = vld [vmem:[%s5 + $0x38] sm:$0xff]
    %v325 = vld [vmem:[%s5 + $0x40] sm:$0xff]
    %v326 = vld [vmem:[%s5 + $0x48] sm:$0xff]
    %v327 = vld [vmem:[%s5 + $0x50] sm:$0xff]
    %v328 = vld [vmem:[%s5 + $0x58] sm:$0xff]
    %v329 = vld [vmem:[%s5 + $0x60] sm:$0xff]
    %v330 = vld [vmem:[%s5 + $0x68] sm:$0xff]
    %v331 = vld [vmem:[%s5 + $0x70] sm:$0xff]
    %v332 = vld [vmem:[%s5 + $0x78] sm:$0xff]
    %v333 = vld [vmem:[%s2] sm:$0x1]
    %v335 = vlaneseq
    %v336 = vshrl.u32 %v335, 7
    %v337 = vsub.s32 0, %v336
    %v338 = vrot.slane %v333, %v337
    %v340 = vmul.f32 %v317, %v338
    %v341 = vmul.f32 %v318, %v338
    %v342 = vmul.f32 %v319, %v338
    %v343 = vmul.f32 %v320, %v338
    %v344 = vmul.f32 %v321, %v338
    %v345 = vmul.f32 %v322, %v338
    %v346 = vmul.f32 %v323, %v338
    %v347 = vmul.f32 %v324, %v338
    %v348 = vmul.f32 %v325, %v338
    %v349 = vmul.f32 %v326, %v338
    %v350 = vmul.f32 %v327, %v338
    %v351 = vmul.f32 %v328, %v338
    %v352 = vmul.f32 %v329, %v338
    %v353 = vmul.f32 %v330, %v338
    %v354 = vmul.f32 %v331, %v338
    %v355 = vmul.f32 %v332, %v338
    %v356 = vld [vmem:[%s3] sm:$0x1]
    %v358 = vlaneseq
    %v359 = vshrl.u32 %v358, 7
    %v360 = vsub.s32 0, %v359
    %v361 = vrot.slane %v356, %v360
    %v363 = vadd.f32 %v340, %v361
    %v364 = vadd.f32 %v341, %v361
    %v365 = vadd.f32 %v342, %v361
    %v366 = vadd.f32 %v343, %v361
    %v367 = vadd.f32 %v344, %v361
    %v368 = vadd.f32 %v345, %v361
    %v369 = vadd.f32 %v346, %v361
    %v370 = vadd.f32 %v347, %v361
    %v371 = vadd.f32 %v348, %v361
    %v372 = vadd.f32 %v349, %v361
    %v373 = vadd.f32 %v350, %v361
    %v374 = vadd.f32 %v351, %v361
    %v375 = vadd.f32 %v352, %v361
    %v376 = vadd.f32 %v353, %v361
    %v377 = vadd.f32 %v354, %v361
    %v378 = vadd.f32 %v355, %v361
    %v379 = vld [vmem:[%s4] sm:$0xff]
    %v380 = vld [vmem:[%s4 + $0x8] sm:$0xff]
    %v381 = vld [vmem:[%s4 + $0x10] sm:$0xff]
    %v382 = vld [vmem:[%s4 + $0x18] sm:$0xff]
    %v383 = vld [vmem:[%s4 + $0x20] sm:$0xff]
    %v384 = vld [vmem:[%s4 + $0x28] sm:$0xff]
    %v385 = vld [vmem:[%s4 + $0x30] sm:$0xff]
    %v386 = vld [vmem:[%s4 + $0x38] sm:$0xff]
    %v387 = vld [vmem:[%s4 + $0x40] sm:$0xff]
    %v388 = vld [vmem:[%s4 + $0x48] sm:$0xff]
    %v389 = vld [vmem:[%s4 + $0x50] sm:$0xff]
    %v390 = vld [vmem:[%s4 + $0x58] sm:$0xff]
    %v391 = vld [vmem:[%s4 + $0x60] sm:$0xff]
    %v392 = vld [vmem:[%s4 + $0x68] sm:$0xff]
    %v393 = vld [vmem:[%s4 + $0x70] sm:$0xff]
    %v394 = vld [vmem:[%s4 + $0x78] sm:$0xff]
    %v395 = vadd.f32 %v363, %v379
    %v396 = vadd.f32 %v364, %v380
    %v397 = vadd.f32 %v365, %v381
    %v398 = vadd.f32 %v366, %v382
    %v399 = vadd.f32 %v367, %v383
    %v400 = vadd.f32 %v368, %v384
    %v401 = vadd.f32 %v369, %v385
    %v402 = vadd.f32 %v370, %v386
    %v403 = vadd.f32 %v371, %v387
    %v404 = vadd.f32 %v372, %v388
    %v405 = vadd.f32 %v373, %v389
    %v406 = vadd.f32 %v374, %v390
    %v407 = vadd.f32 %v375, %v391
    %v408 = vadd.f32 %v376, %v392
    %v409 = vadd.f32 %v377, %v393
    %v410 = vadd.f32 %v378, %v394
    %v411 = vmax.f32 %v395, 0.0
    %v412 = vmax.f32 %v396, 0.0
    %v413 = vmax.f32 %v397, 0.0
    %v414 = vmax.f32 %v398, 0.0
    %v415 = vmax.f32 %v399, 0.0
    %v416 = vmax.f32 %v400, 0.0
    %v417 = vmax.f32 %v401, 0.0
    %v418 = vmax.f32 %v402, 0.0
    %v419 = vmax.f32 %v403, 0.0
    %v420 = vmax.f32 %v404, 0.0
    %v421 = vmax.f32 %v405, 0.0
    %v422 = vmax.f32 %v406, 0.0
    %v423 = vmax.f32 %v407, 0.0
    %v424 = vmax.f32 %v408, 0.0
    %v425 = vmax.f32 %v409, 0.0
    %v426 = vmax.f32 %v410, 0.0
    %427 = vst [vmem:[%s5] sm:$0xff] %v411
    %428 = vst [vmem:[%s5 + $0x8] sm:$0xff] %v412
    %429 = vst [vmem:[%s5 + $0x10] sm:$0xff] %v413
    %430 = vst [vmem:[%s5 + $0x18] sm:$0xff] %v414
    %431 = vst [vmem:[%s5 + $0x20] sm:$0xff] %v415
    %432 = vst [vmem:[%s5 + $0x28] sm:$0xff] %v416
    %433 = vst [vmem:[%s5 + $0x30] sm:$0xff] %v417
    %434 = vst [vmem:[%s5 + $0x38] sm:$0xff] %v418
    %435 = vst [vmem:[%s5 + $0x40] sm:$0xff] %v419
    %436 = vst [vmem:[%s5 + $0x48] sm:$0xff] %v420
    %437 = vst [vmem:[%s5 + $0x50] sm:$0xff] %v421
    %438 = vst [vmem:[%s5 + $0x58] sm:$0xff] %v422
    %439 = vst [vmem:[%s5 + $0x60] sm:$0xff] %v423
    %440 = vst [vmem:[%s5 + $0x68] sm:$0xff] %v424
    %441 = vst [vmem:[%s5 + $0x70] sm:$0xff] %v425
    %442 = vst [vmem:[%s5 + $0x78] sm:$0xff] %v426
  $region29: #{fwd.7} parent=0 // pred_fallthru
    _
  // Predicated region
  $region30: #{fwd.7} parent=0 // pred_check
    _
  $region31: #{fwd.7} parent=0 // pred_check_branch
    %444 = sbr.rel (0) target = $region33
  $region32: #{fwd.7} parent=0 // pred_region
    _
  $region33: #{fwd.7} parent=0 // pred_fallthru
    _
  // Predicated region
  $region34: #{fwd.7} parent=0 // pred_check
    _
  $region35: #{fwd.7} parent=0 // pred_check_branch
    %446 = sbr.rel (0) target = $region37
  $region36: #{fwd.7} parent=0 // pred_region
    _
  $region37: #{fwd.7} parent=0 // pred_fallthru
    _

</llo_original>
